<compile_context>
chip_gen: v5e
topology: v5e:2x2
jax: 0.10.0
libtpu: 0.0.40
codegen_flags: <defaults>
</compile_context>

<pallas_src>
import functools

import jax
import jax.numpy as jnp
import numpy as np
from jax import lax
from jax.experimental import pallas as pl
from jax.experimental.pallas import tpu as pltpu


def _rewire_kernel(h_ref, ht_ref, mask_t_ref, w_kq_ref, w_qk_ref, scale_ref,
                   out_ref, *, n_t: int, substeps: int):
    # ---- normalize node features (center + L2 along the feature axis) ------
    # [N, Fin] copy: feeds the k/q projection (canonical [N,Fin]@[Fin,2Fout]).
    h = h_ref[...]
    h = h - jnp.mean(h, axis=-1, keepdims=True)
    nrm = jnp.sqrt(jnp.sum(h * h, axis=-1, keepdims=True))
    h = h / jnp.maximum(nrm, jnp.float32(1e-12))

    # [Fin, N] copy: lane-dense carried state (same normalization, axis 0).
    ht = ht_ref[...]
    ht = ht - jnp.mean(ht, axis=0, keepdims=True)
    nrm_t = jnp.sqrt(jnp.sum(ht * ht, axis=0, keepdims=True))
    ht = ht / jnp.maximum(nrm_t, jnp.float32(1e-12))

    # ---- fused k/q projections (bf16 MXU inputs, f32 accumulate) -----------
    h_b = h.astype(jnp.bfloat16)
    kq = jnp.dot(h_b, w_kq_ref[...], preferred_element_type=jnp.float32)   # [N, 2Fout] = [k|q]
    qk = jnp.dot(h_b, w_qk_ref[...], preferred_element_type=jnp.float32)   # [N, 2Fout] = [q|k]

    # symmetric score, src rows x dst cols:
    #   S[src,dst] = k[src].q[dst] + q[src].k[dst]   (1/sqrt(Fout) folded into weights)
    s = lax.dot_general(kq.astype(jnp.bfloat16), qk.astype(jnp.bfloat16),
                        (((1,), (1,)), ((), ())),
                        preferred_element_type=jnp.float32)                # [N_src, N_dst]

    # ---- edge softmax over incoming edges (per dst = per column) -----------
    valid = mask_t_ref[...] != 0                                           # int8 compare, no cast
    s_m = jnp.where(valid, s, jnp.float32(-1e30))
    # clamp guards all-masked columns (no in-edges): exp underflows to exact 0 there.
    s_max = jnp.maximum(jnp.max(s_m, axis=0, keepdims=True), jnp.float32(-1e28))
    p = jnp.exp(s_m - s_max)
    inv_den = jnp.float32(1.0) / jnp.maximum(
        jnp.sum(p, axis=0, keepdims=True), jnp.float32(1e-12))             # (1, N) only
    p_t = p * inv_den                                                      # P^T[src, dst]

    # ---- exact propagator of the linear ODE dh/dt = sig(alpha)*(P h - h) ---
    n_nodes = p_t.shape[0]
    row = lax.broadcasted_iota(jnp.int32, (n_nodes, n_nodes), 0)
    col = lax.broadcasted_iota(jnp.int32, (n_nodes, n_nodes), 1)
    eye = jnp.where(row == col, jnp.float32(1.0), jnp.float32(0.0))

    a = (p_t - eye) * scale_ref[0]     # A^T = dt*sigmoid(alpha)*(P^T - I), scale precomputed
    # one RK4 substep == Phi = I + A + A^2/2 + A^3/6 + A^4/24, Horner form:
    # only {eye, a, b} stay live (same 3 matmuls as the power form).
    b = eye + jnp.float32(0.25) * a
    b = eye + jnp.float32(1.0 / 3.0) * jnp.dot(a, b, preferred_element_type=jnp.float32)
    b = eye + jnp.float32(0.5) * jnp.dot(a, b, preferred_element_type=jnp.float32)
    phi = eye + jnp.dot(a, b, preferred_element_type=jnp.float32)          # Phi^T (1 substep)

    # Phi^substeps via binary exponentiation (3 squarings for substeps=8).
    acc = None
    rem = substeps
    while rem > 0:
        if rem & 1:
            acc = phi if acc is None else jnp.dot(acc, phi,
                                                  preferred_element_type=jnp.float32)
        rem >>= 1
        if rem:
            phi = jnp.dot(phi, phi, preferred_element_type=jnp.float32)
    phi = acc                                                              # Phi^T per interval

    # ---- time march: h(t)^T <- h(t)^T @ Phi^T, lane-dense writeback --------
    out_ref[0] = ht.astype(out_ref.dtype)
    h_cur = ht
    for i in range(1, n_t):            # n_t is static -> fully unrolled, no grid overhead
        h_cur = jnp.dot(h_cur, phi, preferred_element_type=jnp.float32)    # [Fin,N]@[N,N]
        out_ref[i] = h_cur.astype(out_ref.dtype)


def rewire_forward(h, adj_mask, wk, wq, alpha, *, t: float = 1.0, n: int = 8,
                   substeps: int = 8):
    """h: [N, Fin]; adj_mask: [N_dst, N_src] (nonzero => edge src->dst);
    wk, wq: [Fout, Fin]; alpha: scalar. Returns [n, N, Fin] = h(t_i), t_i in linspace(0,t,n)."""
    N, Fin = h.shape
    Fout = wk.shape[0]
    assert substeps >= 1 and n >= 1

    h32 = jnp.asarray(h, jnp.float32)
    ht32 = h32.T                                          # [Fin, N] lane-dense copy
    # transposed 0/1 mask [src, dst] (int8: 4x less DMA/VMEM than f32)
    mask_t = (jnp.asarray(adj_mask) != 0).astype(jnp.int8).T

    # one-time parameter transforms (folded constants):
    #   * 1/sqrt(Fout) score scale -> Fout**-0.25 on each projection weight
    #   * sigmoid(alpha) * dt      -> single SMEM scalar
    ps = float(Fout) ** -0.25
    wk_t = jnp.asarray(wk, jnp.float32).T * ps            # [Fin, Fout]
    wq_t = jnp.asarray(wq, jnp.float32).T * ps
    w_kq = jnp.concatenate([wk_t, wq_t], axis=1).astype(jnp.bfloat16)   # [Fin, 2Fout] -> [k|q]
    w_qk = jnp.concatenate([wq_t, wk_t], axis=1).astype(jnp.bfloat16)   # [Fin, 2Fout] -> [q|k]

    dt = float(t) / (max(n - 1, 1) * substeps)
    scale = (jax.nn.sigmoid(jnp.asarray(alpha, jnp.float32))
             * jnp.float32(dt)).reshape(1)                # SMEM scalar

    kernel = functools.partial(_rewire_kernel, n_t=n, substeps=substeps)
    out_t = pl.pallas_call(
        kernel,
        out_shape=jax.ShapeDtypeStruct((n, Fin, N), jnp.float32),
        in_specs=[
            pl.BlockSpec(memory_space=pltpu.MemorySpace.VMEM),   # h    [N, Fin]
            pl.BlockSpec(memory_space=pltpu.MemorySpace.VMEM),   # h^T  [Fin, N]
            pl.BlockSpec(memory_space=pltpu.MemorySpace.VMEM),   # mask^T int8 [N, N]
            pl.BlockSpec(memory_space=pltpu.MemorySpace.VMEM),   # [Wk^T|Wq^T] bf16
            pl.BlockSpec(memory_space=pltpu.MemorySpace.VMEM),   # [Wq^T|Wk^T] bf16
            pl.BlockSpec(memory_space=pltpu.MemorySpace.SMEM),   # sigmoid(alpha)*dt
        ],
        out_specs=pl.BlockSpec(memory_space=pltpu.MemorySpace.VMEM),
    )(h32, ht32, mask_t, w_kq, w_qk, scale)
    return jnp.swapaxes(out_t, 1, 2)                      # [n, N, Fin], as in the module


def _reference(h, adj_mask, wk, wq, alpha, *, t=1.0, n=8, substeps=8):
    """Pure-JAX reference with step-by-step RK4 (identical math to the original module)."""
    h = h.astype(jnp.float32)
    h = h - jnp.mean(h, -1, keepdims=True)
    h = h / jnp.maximum(jnp.sqrt(jnp.sum(h * h, -1, keepdims=True)), 1e-12)
    k = h @ wk.T
    q = h @ wq.T
    a = k @ q.T
    s = (a + a.T) / (k.shape[-1] ** 0.5)
    s_masked = jnp.where(adj_mask > 0, s, -1e30)
    p = jnp.exp(s_masked - jnp.max(s_masked, -1, keepdims=True)) * adj_mask
    P = p / jnp.maximum(jnp.sum(p, -1, keepdims=True), 1e-12)
    sig = jax.nn.sigmoid(alpha)
    f = lambda hh: sig * (P @ hh - hh)
    dt = t / (max(n - 1, 1) * substeps)
    outs = [h]
    h_cur = h
    for _ in range(1, n):
        for _ in range(substeps):
            k1 = f(h_cur); k2 = f(h_cur + 0.5 * dt * k1)
            k3 = f(h_cur + 0.5 * dt * k2); k4 = f(h_cur + dt * k3)
            h_cur = h_cur + (dt / 6.0) * (k1 + 2 * k2 + 2 * k3 + k4)
        outs.append(h_cur)
    return jnp.stack(outs, 0)


if __name__ == "__main__":
    N, Fin, Fout, n_time = 128, 32, 32, 8

    key = jax.random.PRNGKey(0)
    k_h, k_adj = jax.random.split(key)

    h = jax.random.normal(k_h, (N, Fin), dtype=jnp.float32)

    # Deterministic random sparse graph, densified to [dst, src] mask, + self loops.
    adj = (jax.random.uniform(k_adj, (N, N)) < 0.1).astype(jnp.float32)
    adj = jnp.maximum(adj, jnp.eye(N, dtype=jnp.float32))

    # Parameters exactly as in __init__: constant 1e-5 weights, alpha = 0.
    wk = jnp.full((Fout, Fin), 1e-5, dtype=jnp.float32)
    wq = jnp.full((Fout, Fin), 1e-5, dtype=jnp.float32)
    alpha = jnp.float32(0.0)

    out = rewire_forward(h, adj, wk, wq, alpha, t=1.0, n=n_time)
    out = jax.block_until_ready(out)

    ref = _reference(h, adj, wk, wq, alpha, t=1.0, n=n_time)
    # Propagator-matrix integration changes f32 accumulation order vs step-by-step RK4.
    np.testing.assert_allclose(np.asarray(out), np.asarray(ref),
                               rtol=1e-4, atol=1e-5)
    assert out.shape == (n_time, N, Fin)
    print("KERNEL_OK")
</pallas_src>

<mosaic_0001>
module attributes {stable_mosaic.version = 11 : i64} {
  func.func @_rewire_kernel(%arg0: memref<128x32xf32, #tpu.memory_space<vmem>>, %arg1: memref<32x128xf32, #tpu.memory_space<vmem>>, %arg2: memref<128x128xi8, #tpu.memory_space<vmem>>, %arg3: memref<32x64xbf16, #tpu.memory_space<vmem>>, %arg4: memref<32x64xbf16, #tpu.memory_space<vmem>>, %arg5: memref<1xf32, #tpu.memory_space<smem>>, %arg6: memref<8x32x128xf32, #tpu.memory_space<vmem>>) attributes {dimension_semantics = [], scalar_prefetch = 0 : i64, scratch_operands = 0 : i64, tpu.core_type = #tpu.core_type<tc>} {
    %c0 = arith.constant 0 : index
    %c0_0 = arith.constant 0 : index
    %0 = vector.load %arg0[%c0, %c0_0] : memref<128x32xf32, #tpu.memory_space<vmem>>, vector<128x32xf32>
    %cst = arith.constant dense<0.000000e+00> : vector<128xf32>
    %1 = vector.multi_reduction <add>, %0, %cst [1] : vector<128x32xf32> to vector<128xf32>
    %2 = vector.shape_cast %1 : vector<128xf32> to vector<128x1xf32>
    %cst_1 = arith.constant 3.200000e+01 : f32
    %3 = vector.broadcast %cst_1 : f32 to vector<128x1xf32>
    %4 = arith.divf %2, %3 : vector<128x1xf32>
    %5 = vector.broadcast %4 : vector<128x1xf32> to vector<128x32xf32>
    %6 = arith.subf %0, %5 : vector<128x32xf32>
    %7 = arith.mulf %6, %6 : vector<128x32xf32>
    %cst_2 = arith.constant dense<0.000000e+00> : vector<128xf32>
    %8 = vector.multi_reduction <add>, %7, %cst_2 [1] : vector<128x32xf32> to vector<128xf32>
    %9 = vector.shape_cast %8 : vector<128xf32> to vector<128x1xf32>
    %10 = math.sqrt %9 : vector<128x1xf32>
    %cst_3 = arith.constant 9.99999996E-13 : f32
    %11 = vector.broadcast %cst_3 : f32 to vector<128x1xf32>
    %12 = arith.maximumf %10, %11 : vector<128x1xf32>
    %13 = vector.broadcast %12 : vector<128x1xf32> to vector<128x32xf32>
    %14 = arith.divf %6, %13 : vector<128x32xf32>
    %c0_4 = arith.constant 0 : index
    %c0_5 = arith.constant 0 : index
    %15 = vector.load %arg1[%c0_4, %c0_5] : memref<32x128xf32, #tpu.memory_space<vmem>>, vector<32x128xf32>
    %cst_6 = arith.constant dense<0.000000e+00> : vector<128xf32>
    %16 = vector.multi_reduction <add>, %15, %cst_6 [0] : vector<32x128xf32> to vector<128xf32>
    %17 = vector.shape_cast %16 : vector<128xf32> to vector<1x128xf32>
    %cst_7 = arith.constant 3.200000e+01 : f32
    %18 = vector.broadcast %cst_7 : f32 to vector<1x128xf32>
    %19 = arith.divf %17, %18 : vector<1x128xf32>
    %20 = vector.broadcast %19 : vector<1x128xf32> to vector<32x128xf32>
    %21 = arith.subf %15, %20 : vector<32x128xf32>
    %22 = arith.mulf %21, %21 : vector<32x128xf32>
    %cst_8 = arith.constant dense<0.000000e+00> : vector<128xf32>
    %23 = vector.multi_reduction <add>, %22, %cst_8 [0] : vector<32x128xf32> to vector<128xf32>
    %24 = vector.shape_cast %23 : vector<128xf32> to vector<1x128xf32>
    %25 = math.sqrt %24 : vector<1x128xf32>
    %cst_9 = arith.constant 9.99999996E-13 : f32
    %26 = vector.broadcast %cst_9 : f32 to vector<1x128xf32>
    %27 = arith.maximumf %25, %26 : vector<1x128xf32>
    %28 = vector.broadcast %27 : vector<1x128xf32> to vector<32x128xf32>
    %29 = arith.divf %21, %28 : vector<32x128xf32>
    %30 = arith.truncf %14 : vector<128x32xf32> to vector<128x32xbf16>
    %c0_10 = arith.constant 0 : index
    %c0_11 = arith.constant 0 : index
    %31 = vector.load %arg3[%c0_10, %c0_11] : memref<32x64xbf16, #tpu.memory_space<vmem>>, vector<32x64xbf16>
    %cst_12 = arith.constant dense<0.000000e+00> : vector<128x64xf32>
    %32 = tpu.matmul %30, %31, %cst_12 {dimension_numbers = #tpu.dot_dimension_numbers<[1], [0], [0], [1], [0, 0, 1, 1], [], []>} : vector<128x32xbf16>, vector<32x64xbf16>, vector<128x64xf32> -> vector<128x64xf32>
    %c0_13 = arith.constant 0 : index
    %c0_14 = arith.constant 0 : index
    %33 = vector.load %arg4[%c0_13, %c0_14] : memref<32x64xbf16, #tpu.memory_space<vmem>>, vector<32x64xbf16>
    %cst_15 = arith.constant dense<0.000000e+00> : vector<128x64xf32>
    %34 = tpu.matmul %30, %33, %cst_15 {dimension_numbers = #tpu.dot_dimension_numbers<[1], [0], [0], [1], [0, 0, 1, 1], [], []>} : vector<128x32xbf16>, vector<32x64xbf16>, vector<128x64xf32> -> vector<128x64xf32>
    %35 = arith.truncf %32 : vector<128x64xf32> to vector<128x64xbf16>
    %36 = arith.truncf %34 : vector<128x64xf32> to vector<128x64xbf16>
    %cst_16 = arith.constant dense<0.000000e+00> : vector<128x128xf32>
    %37 = tpu.matmul %35, %36, %cst_16 {dimension_numbers = #tpu.dot_dimension_numbers<[1], [1], [0], [0], [0, 0, 1, 0], [], []>} : vector<128x64xbf16>, vector<128x64xbf16>, vector<128x128xf32> -> vector<128x128xf32>
    %c0_17 = arith.constant 0 : index
    %c0_18 = arith.constant 0 : index
    %38 = vector.load %arg2[%c0_17, %c0_18] : memref<128x128xi8, #tpu.memory_space<vmem>>, vector<128x128xi8>
    %c0_i8 = arith.constant 0 : i8
    %39 = vector.broadcast %c0_i8 : i8 to vector<128x128xi8>
    %40 = arith.cmpi ne, %38, %39 : vector<128x128xi8>
    %cst_19 = arith.constant -1.000000e+30 : f32
    %41 = vector.broadcast %cst_19 : f32 to vector<128x128xf32>
    %42 = arith.select %40, %37, %41 : vector<128x128xi1>, vector<128x128xf32>
    %cst_20 = arith.constant dense<0xFF800000> : vector<128xf32>
    %43 = vector.multi_reduction <maximumf>, %42, %cst_20 [0] : vector<128x128xf32> to vector<128xf32>
    %44 = vector.shape_cast %43 : vector<128xf32> to vector<1x128xf32>
    %cst_21 = arith.constant -9.99999944E+27 : f32
    %45 = vector.broadcast %cst_21 : f32 to vector<1x128xf32>
    %46 = arith.maximumf %44, %45 : vector<1x128xf32>
    %47 = vector.broadcast %46 : vector<1x128xf32> to vector<128x128xf32>
    %48 = arith.subf %42, %47 : vector<128x128xf32>
    %49 = math.exp %48 : vector<128x128xf32>
    %cst_22 = arith.constant dense<0.000000e+00> : vector<128xf32>
    %50 = vector.multi_reduction <add>, %49, %cst_22 [0] : vector<128x128xf32> to vector<128xf32>
    %51 = vector.shape_cast %50 : vector<128xf32> to vector<1x128xf32>
    %cst_23 = arith.constant 9.99999996E-13 : f32
    %52 = vector.broadcast %cst_23 : f32 to vector<1x128xf32>
    %53 = arith.maximumf %51, %52 : vector<1x128xf32>
    %cst_24 = arith.constant 1.000000e+00 : f32
    %54 = vector.broadcast %cst_24 : f32 to vector<1x128xf32>
    %55 = arith.divf %54, %53 : vector<1x128xf32>
    %56 = vector.broadcast %55 : vector<1x128xf32> to vector<128x128xf32>
    %57 = arith.mulf %49, %56 : vector<128x128xf32>
    %58 = tpu.iota {dimensions = array<i32: 0>} : vector<128x128xi32>
    %59 = tpu.iota {dimensions = array<i32: 1>} : vector<128x128xi32>
    %60 = arith.cmpi eq, %58, %59 : vector<128x128xi32>
    %cst_25 = arith.constant 1.000000e+00 : f32
    %cst_26 = arith.constant 0.000000e+00 : f32
    %61 = vector.broadcast %cst_25 : f32 to vector<128x128xf32>
    %62 = vector.broadcast %cst_26 : f32 to vector<128x128xf32>
    %63 = arith.select %60, %61, %62 : vector<128x128xi1>, vector<128x128xf32>
    %64 = arith.subf %57, %63 : vector<128x128xf32>
    %c0_27 = arith.constant 0 : index
    %65 = memref.load %arg5[%c0_27] : memref<1xf32, #tpu.memory_space<smem>>
    %66 = vector.broadcast %65 : f32 to vector<128x128xf32>
    %67 = arith.mulf %64, %66 : vector<128x128xf32>
    %cst_28 = arith.constant 2.500000e-01 : f32
    %68 = vector.broadcast %cst_28 : f32 to vector<128x128xf32>
    %69 = arith.mulf %68, %67 : vector<128x128xf32>
    %70 = arith.addf %63, %69 : vector<128x128xf32>
    %cst_29 = arith.constant dense<0.000000e+00> : vector<128x128xf32>
    %71 = tpu.matmul %67, %70, %cst_29 {dimension_numbers = #tpu.dot_dimension_numbers<[1], [0], [0], [1], [0, 0, 1, 1], [], []>} : vector<128x128xf32>, vector<128x128xf32>, vector<128x128xf32> -> vector<128x128xf32>
    %cst_30 = arith.constant 0.333333343 : f32
    %72 = vector.broadcast %cst_30 : f32 to vector<128x128xf32>
    %73 = arith.mulf %72, %71 : vector<128x128xf32>
    %74 = arith.addf %63, %73 : vector<128x128xf32>
    %cst_31 = arith.constant dense<0.000000e+00> : vector<128x128xf32>
    %75 = tpu.matmul %67, %74, %cst_31 {dimension_numbers = #tpu.dot_dimension_numbers<[1], [0], [0], [1], [0, 0, 1, 1], [], []>} : vector<128x128xf32>, vector<128x128xf32>, vector<128x128xf32> -> vector<128x128xf32>
    %cst_32 = arith.constant 5.000000e-01 : f32
    %76 = vector.broadcast %cst_32 : f32 to vector<128x128xf32>
    %77 = arith.mulf %76, %75 : vector<128x128xf32>
    %78 = arith.addf %63, %77 : vector<128x128xf32>
    %cst_33 = arith.constant dense<0.000000e+00> : vector<128x128xf32>
    %79 = tpu.matmul %67, %78, %cst_33 {dimension_numbers = #tpu.dot_dimension_numbers<[1], [0], [0], [1], [0, 0, 1, 1], [], []>} : vector<128x128xf32>, vector<128x128xf32>, vector<128x128xf32> -> vector<128x128xf32>
    %80 = arith.addf %63, %79 : vector<128x128xf32>
    %cst_34 = arith.constant dense<0.000000e+00> : vector<128x128xf32>
    %81 = tpu.matmul %80, %80, %cst_34 {dimension_numbers = #tpu.dot_dimension_numbers<[1], [0], [0], [1], [0, 0, 1, 1], [], []>} : vector<128x128xf32>, vector<128x128xf32>, vector<128x128xf32> -> vector<128x128xf32>
    %cst_35 = arith.constant dense<0.000000e+00> : vector<128x128xf32>
    %82 = tpu.matmul %81, %81, %cst_35 {dimension_numbers = #tpu.dot_dimension_numbers<[1], [0], [0], [1], [0, 0, 1, 1], [], []>} : vector<128x128xf32>, vector<128x128xf32>, vector<128x128xf32> -> vector<128x128xf32>
    %cst_36 = arith.constant dense<0.000000e+00> : vector<128x128xf32>
    %83 = tpu.matmul %82, %82, %cst_36 {dimension_numbers = #tpu.dot_dimension_numbers<[1], [0], [0], [1], [0, 0, 1, 1], [], []>} : vector<128x128xf32>, vector<128x128xf32>, vector<128x128xf32> -> vector<128x128xf32>
    %c0_37 = arith.constant 0 : index
    %c0_38 = arith.constant 0 : index
    %c0_39 = arith.constant 0 : index
    %84 = vector.load %arg6[%c0_37, %c0_38, %c0_39] : memref<8x32x128xf32, #tpu.memory_space<vmem>>, vector<1x32x128xf32>
    %85 = vector.shape_cast %84 : vector<1x32x128xf32> to vector<32x128xf32>
    %86 = vector.shape_cast %29 : vector<32x128xf32> to vector<1x32x128xf32>
    tpu.vector_store %arg6[%c0_37, %c0_38, %c0_39], %86 {strides = array<i32>} : memref<8x32x128xf32, #tpu.memory_space<vmem>>, vector<1x32x128xf32>,
    %cst_40 = arith.constant dense<0.000000e+00> : vector<32x128xf32>
    %87 = tpu.matmul %29, %83, %cst_40 {dimension_numbers = #tpu.dot_dimension_numbers<[1], [0], [0], [1], [0, 0, 1, 1], [], []>} : vector<32x128xf32>, vector<128x128xf32>, vector<32x128xf32> -> vector<32x128xf32>
    %c1 = arith.constant 1 : index
    %c0_41 = arith.constant 0 : index
    %c0_42 = arith.constant 0 : index
    %88 = vector.load %arg6[%c1, %c0_41, %c0_42] : memref<8x32x128xf32, #tpu.memory_space<vmem>>, vector<1x32x128xf32>
    %89 = vector.shape_cast %88 : vector<1x32x128xf32> to vector<32x128xf32>
    %90 = vector.shape_cast %87 : vector<32x128xf32> to vector<1x32x128xf32>
    tpu.vector_store %arg6[%c1, %c0_41, %c0_42], %90 {strides = array<i32>} : memref<8x32x128xf32, #tpu.memory_space<vmem>>, vector<1x32x128xf32>,
    %cst_43 = arith.constant dense<0.000000e+00> : vector<32x128xf32>
    %91 = tpu.matmul %87, %83, %cst_43 {dimension_numbers = #tpu.dot_dimension_numbers<[1], [0], [0], [1], [0, 0, 1, 1], [], []>} : vector<32x128xf32>, vector<128x128xf32>, vector<32x128xf32> -> vector<32x128xf32>
    %c2 = arith.constant 2 : index
    %c0_44 = arith.constant 0 : index
    %c0_45 = arith.constant 0 : index
    %92 = vector.load %arg6[%c2, %c0_44, %c0_45] : memref<8x32x128xf32, #tpu.memory_space<vmem>>, vector<1x32x128xf32>
    %93 = vector.shape_cast %92 : vector<1x32x128xf32> to vector<32x128xf32>
    %94 = vector.shape_cast %91 : vector<32x128xf32> to vector<1x32x128xf32>
    tpu.vector_store %arg6[%c2, %c0_44, %c0_45], %94 {strides = array<i32>} : memref<8x32x128xf32, #tpu.memory_space<vmem>>, vector<1x32x128xf32>,
    %cst_46 = arith.constant dense<0.000000e+00> : vector<32x128xf32>
    %95 = tpu.matmul %91, %83, %cst_46 {dimension_numbers = #tpu.dot_dimension_numbers<[1], [0], [0], [1], [0, 0, 1, 1], [], []>} : vector<32x128xf32>, vector<128x128xf32>, vector<32x128xf32> -> vector<32x128xf32>
    %c3 = arith.constant 3 : index
    %c0_47 = arith.constant 0 : index
    %c0_48 = arith.constant 0 : index
    %96 = vector.load %arg6[%c3, %c0_47, %c0_48] : memref<8x32x128xf32, #tpu.memory_space<vmem>>, vector<1x32x128xf32>
    %97 = vector.shape_cast %96 : vector<1x32x128xf32> to vector<32x128xf32>
    %98 = vector.shape_cast %95 : vector<32x128xf32> to vector<1x32x128xf32>
    tpu.vector_store %arg6[%c3, %c0_47, %c0_48], %98 {strides = array<i32>} : memref<8x32x128xf32, #tpu.memory_space<vmem>>, vector<1x32x128xf32>,
    %cst_49 = arith.constant dense<0.000000e+00> : vector<32x128xf32>
    %99 = tpu.matmul %95, %83, %cst_49 {dimension_numbers = #tpu.dot_dimension_numbers<[1], [0], [0], [1], [0, 0, 1, 1], [], []>} : vector<32x128xf32>, vector<128x128xf32>, vector<32x128xf32> -> vector<32x128xf32>
    %c4 = arith.constant 4 : index
    %c0_50 = arith.constant 0 : index
    %c0_51 = arith.constant 0 : index
    %100 = vector.load %arg6[%c4, %c0_50, %c0_51] : memref<8x32x128xf32, #tpu.memory_space<vmem>>, vector<1x32x128xf32>
    %101 = vector.shape_cast %100 : vector<1x32x128xf32> to vector<32x128xf32>
    %102 = vector.shape_cast %99 : vector<32x128xf32> to vector<1x32x128xf32>
    tpu.vector_store %arg6[%c4, %c0_50, %c0_51], %102 {strides = array<i32>} : memref<8x32x128xf32, #tpu.memory_space<vmem>>, vector<1x32x128xf32>,
    %cst_52 = arith.constant dense<0.000000e+00> : vector<32x128xf32>
    %103 = tpu.matmul %99, %83, %cst_52 {dimension_numbers = #tpu.dot_dimension_numbers<[1], [0], [0], [1], [0, 0, 1, 1], [], []>} : vector<32x128xf32>, vector<128x128xf32>, vector<32x128xf32> -> vector<32x128xf32>
    %c5 = arith.constant 5 : index
    %c0_53 = arith.constant 0 : index
    %c0_54 = arith.constant 0 : index
    %104 = vector.load %arg6[%c5, %c0_53, %c0_54] : memref<8x32x128xf32, #tpu.memory_space<vmem>>, vector<1x32x128xf32>
    %105 = vector.shape_cast %104 : vector<1x32x128xf32> to vector<32x128xf32>
    %106 = vector.shape_cast %103 : vector<32x128xf32> to vector<1x32x128xf32>
    tpu.vector_store %arg6[%c5, %c0_53, %c0_54], %106 {strides = array<i32>} : memref<8x32x128xf32, #tpu.memory_space<vmem>>, vector<1x32x128xf32>,
    %cst_55 = arith.constant dense<0.000000e+00> : vector<32x128xf32>
    %107 = tpu.matmul %103, %83, %cst_55 {dimension_numbers = #tpu.dot_dimension_numbers<[1], [0], [0], [1], [0, 0, 1, 1], [], []>} : vector<32x128xf32>, vector<128x128xf32>, vector<32x128xf32> -> vector<32x128xf32>
    %c6 = arith.constant 6 : index
    %c0_56 = arith.constant 0 : index
    %c0_57 = arith.constant 0 : index
    %108 = vector.load %arg6[%c6, %c0_56, %c0_57] : memref<8x32x128xf32, #tpu.memory_space<vmem>>, vector<1x32x128xf32>
    %109 = vector.shape_cast %108 : vector<1x32x128xf32> to vector<32x128xf32>
    %110 = vector.shape_cast %107 : vector<32x128xf32> to vector<1x32x128xf32>
    tpu.vector_store %arg6[%c6, %c0_56, %c0_57], %110 {strides = array<i32>} : memref<8x32x128xf32, #tpu.memory_space<vmem>>, vector<1x32x128xf32>,
    %cst_58 = arith.constant dense<0.000000e+00> : vector<32x128xf32>
    %111 = tpu.matmul %107, %83, %cst_58 {dimension_numbers = #tpu.dot_dimension_numbers<[1], [0], [0], [1], [0, 0, 1, 1], [], []>} : vector<32x128xf32>, vector<128x128xf32>, vector<32x128xf32> -> vector<32x128xf32>
    %c7 = arith.constant 7 : index
    %c0_59 = arith.constant 0 : index
    %c0_60 = arith.constant 0 : index
    %112 = vector.load %arg6[%c7, %c0_59, %c0_60] : memref<8x32x128xf32, #tpu.memory_space<vmem>>, vector<1x32x128xf32>
    %113 = vector.shape_cast %112 : vector<1x32x128xf32> to vector<32x128xf32>
    %114 = vector.shape_cast %111 : vector<32x128xf32> to vector<1x32x128xf32>
    tpu.vector_store %arg6[%c7, %c0_59, %c0_60], %114 {strides = array<i32>} : memref<8x32x128xf32, #tpu.memory_space<vmem>>, vector<1x32x128xf32>,
    return
  }
}

</mosaic_0001>

<llo_original>
// kernel: tpu_custom_call.1
$region0: #{tpu_custom_call.1}
  #allocation0 [shape = 'u32[]', space=smem, size = 0x4, offset = 0x4, fixed_abs, tag = 'smem constant byte address 0x4 - core index']
  #allocation1 [shape = 'u32[72,128]{1,0:T(1,128)}', space=vmem, size = 0x9000, scoped, tag = 'internal scratch']
  #allocation2 [shape = 'f32[1]{0:T(128)S(6)}', space=smem, size = 0x200, scoped, tag = 'scoped memory for tpu_custom_call.1']
  %s0 = inlined_call_operand.vmem [shape: f32[128,32], index: 0, kind: input, shape index: {}]
  %s1 = inlined_call_operand.vmem [shape: f32[32,128], index: 1, kind: input, shape index: {}]
  %s2 = inlined_call_operand.vmem [shape: s8[128,128], index: 2, kind: input, shape index: {}]
  %s3 = inlined_call_operand.vmem [shape: bf16[32,64], index: 3, kind: input, shape index: {}]
  %s4 = inlined_call_operand.vmem [shape: bf16[32,64], index: 4, kind: input, shape index: {}]
  %s5 = inlined_call_operand.<no memory space> [shape: f32[1], index: 5, kind: input, shape index: {}]
  %s6 = inlined_call_operand.hbm [shape: f32[8,32,128], index: 6, kind: output, shape index: {}]
  %s7 = sld [smem:[#allocation0]]
  $region34: #{tpu_custom_call.1} parent=0
    _
  %s9 = ssub.s32 1, %s7
  %s10 = scalar_select 0, %s9, %s7
  %11 = sst [smem:[#allocation2]] %s5
  $region1: #{tpu_custom_call.1} parent=0
    #allocation3 [shape = 'u8[131072]{0}', space=vmem, size = 0x20000, scoped, tag = 'output window, operand 0, single buffered']
    #allocation4 [shape = 's32[1]{0}', space=sflag, size = 0x4, scoped, tag = 'scoped memory for tpu_custom_call.1']
    %12 = vsyncpa [#allocation4], 0
    // Predicated region
    $region2: #{tpu_custom_call.1} parent=1 // pred_check
      _
    $region3: #{tpu_custom_call.1} parent=1 // pred_check_branch
      %14 = sbr.rel (0) target = $region5
    $region4: #{tpu_custom_call.1} parent=1 // pred_region
      _
    $region5: #{tpu_custom_call.1} parent=1 // pred_fallthru
      _
    // Predicated region
    $region6: #{tpu_custom_call.1} parent=1 // pred_check
      _
    $region7: #{tpu_custom_call.1} parent=1 // pred_check_branch
      %16 = sbr.rel (0) target = $region9
    $region8: #{tpu_custom_call.1} parent=1 // pred_region
      _
    $region9: #{tpu_custom_call.1} parent=1 // pred_fallthru
      _
    // Predicated region
    $region10: #{tpu_custom_call.1} parent=1 // pred_check
      _
    $region11: #{tpu_custom_call.1} parent=1 // pred_check_branch
      %18 = sbr.rel (0) target = $region13
    $region12: #{tpu_custom_call.1} parent=1 // pred_region
      _
    $region13: #{tpu_custom_call.1} parent=1 // pred_fallthru
      _
    // Predicated region
    $region14: #{tpu_custom_call.1} parent=1 // pred_check
      _
    $region15: #{tpu_custom_call.1} parent=1 // pred_check_branch
      %20 = sbr.rel (0) target = $region17
    $region16: #{tpu_custom_call.1} parent=1 // pred_region
      _
    $region17: #{tpu_custom_call.1} parent=1 // pred_fallthru
      _
    // Predicated region
    $region18: #{tpu_custom_call.1} parent=1 // pred_check
      _
    $region19: #{tpu_custom_call.1} parent=1 // pred_check_branch
      %22 = sbr.rel (0) target = $region21
    $region20: #{tpu_custom_call.1} parent=1 // pred_region
      _
    $region21: #{tpu_custom_call.1} parent=1 // pred_fallthru
      _
    // Predicated region
    $region22: #{tpu_custom_call.1} parent=1 // pred_check
      _
    $region23: #{tpu_custom_call.1} parent=1 // pred_check_branch
      %24 = sbr.rel (0) target = $region25
    $region24: #{tpu_custom_call.1} parent=1 // pred_region
      _
    $region25: #{tpu_custom_call.1} parent=1 // pred_fallthru
      _
    %v28 = vld [vmem:[%s0] sm:$0xff]
    %v29 = vld [vmem:[%s0 + $0x8] sm:$0xff]
    %v30 = vld [vmem:[%s0 + $0x10] sm:$0xff]
    %v31 = vld [vmem:[%s0 + $0x18] sm:$0xff]
    %v32 = vld [vmem:[%s0 + $0x20] sm:$0xff]
    %v33 = vld [vmem:[%s0 + $0x28] sm:$0xff]
    %v34 = vld [vmem:[%s0 + $0x30] sm:$0xff]
    %v35 = vld [vmem:[%s0 + $0x38] sm:$0xff]
    %v36 = vld [vmem:[%s0 + $0x40] sm:$0xff]
    %v37 = vld [vmem:[%s0 + $0x48] sm:$0xff]
    %v38 = vld [vmem:[%s0 + $0x50] sm:$0xff]
    %v39 = vld [vmem:[%s0 + $0x58] sm:$0xff]
    %v40 = vld [vmem:[%s0 + $0x60] sm:$0xff]
    %v41 = vld [vmem:[%s0 + $0x68] sm:$0xff]
    %v42 = vld [vmem:[%s0 + $0x70] sm:$0xff]
    %v43 = vld [vmem:[%s0 + $0x78] sm:$0xff]
    %vm44 = vcmask 261120
    %v45 = vsel %vm44, %v28, 0.0
    %46 = vadd.xlane.f32.xlu0 %v45
    %v47 = vpop.xlane.xlu0 %46
    %v48 = vsel %vm44, %v29, 0.0
    %49 = vadd.xlane.f32.xlu0 %v48
    %v50 = vpop.xlane.xlu0 %49
    %v51 = vsel %vm44, %v30, 0.0
    %52 = vadd.xlane.f32.xlu0 %v51
    %v53 = vpop.xlane.xlu0 %52
    %v54 = vsel %vm44, %v31, 0.0
    %55 = vadd.xlane.f32.xlu0 %v54
    %v56 = vpop.xlane.xlu0 %55
    %v57 = vsel %vm44, %v32, 0.0
    %58 = vadd.xlane.f32.xlu0 %v57
    %v59 = vpop.xlane.xlu0 %58
    %v60 = vsel %vm44, %v33, 0.0
    %61 = vadd.xlane.f32.xlu0 %v60
    %v62 = vpop.xlane.xlu0 %61
    %v63 = vsel %vm44, %v34, 0.0
    %64 = vadd.xlane.f32.xlu0 %v63
    %v65 = vpop.xlane.xlu0 %64
    %v66 = vsel %vm44, %v35, 0.0
    %67 = vadd.xlane.f32.xlu0 %v66
    %v68 = vpop.xlane.xlu0 %67
    %v69 = vsel %vm44, %v36, 0.0
    %70 = vadd.xlane.f32.xlu0 %v69
    %v71 = vpop.xlane.xlu0 %70
    %v72 = vsel %vm44, %v37, 0.0
    %73 = vadd.xlane.f32.xlu0 %v72
    %v74 = vpop.xlane.xlu0 %73
    %v75 = vsel %vm44, %v38, 0.0
    %76 = vadd.xlane.f32.xlu0 %v75
    %v77 = vpop.xlane.xlu0 %76
    %v78 = vsel %vm44, %v39, 0.0
    %79 = vadd.xlane.f32.xlu0 %v78
    %v80 = vpop.xlane.xlu0 %79
    %v81 = vsel %vm44, %v40, 0.0
    %82 = vadd.xlane.f32.xlu0 %v81
    %v83 = vpop.xlane.xlu0 %82
    %v84 = vsel %vm44, %v41, 0.0
    %85 = vadd.xlane.f32.xlu0 %v84
    %v86 = vpop.xlane.xlu0 %85
    %v87 = vsel %vm44, %v42, 0.0
    %88 = vadd.xlane.f32.xlu0 %v87
    %v89 = vpop.xlane.xlu0 %88
    %v90 = vsel %vm44, %v43, 0.0
    %91 = vadd.xlane.f32.xlu0 %v90
    %v92 = vpop.xlane.xlu0 %91
    %v93 = vrcp.pop 32.0
    %v94 = vmul.f32 32.0, %v93
    %v95 = vsub.f32 1.0, %v94
    %v96 = vmul.f32 %v93, %v95
    %v97 = vadd.f32 %v93, %v96
    %vm98 = vweird.f32 %v93
    %v99 = vsel %vm98, %v93, %v97
    %v100 = vmul.f32 %v47, %v99
    %v101 = vmul.f32 %v50, %v99
    %v102 = vmul.f32 %v53, %v99
    %v103 = vmul.f32 %v56, %v99
    %v104 = vmul.f32 %v59, %v99
    %v105 = vmul.f32 %v62, %v99
    %v106 = vmul.f32 %v65, %v99
    %v107 = vmul.f32 %v68, %v99
    %v108 = vmul.f32 %v71, %v99
    %v109 = vmul.f32 %v74, %v99
    %v110 = vmul.f32 %v77, %v99
    %v111 = vmul.f32 %v80, %v99
    %v112 = vmul.f32 %v83, %v99
    %v113 = vmul.f32 %v86, %v99
    %v114 = vmul.f32 %v89, %v99
    %v115 = vmul.f32 %v92, %v99
    %v116 = vsub.f32 %v28, %v100
    %v117 = vsub.f32 %v29, %v101
    %v118 = vsub.f32 %v30, %v102
    %v119 = vsub.f32 %v31, %v103
    %v120 = vsub.f32 %v32, %v104
    %v121 = vsub.f32 %v33, %v105
    %v122 = vsub.f32 %v34, %v106
    %v123 = vsub.f32 %v35, %v107
    %v124 = vsub.f32 %v36, %v108
    %v125 = vsub.f32 %v37, %v109
    %v126 = vsub.f32 %v38, %v110
    %v127 = vsub.f32 %v39, %v111
    %v128 = vsub.f32 %v40, %v112
    %v129 = vsub.f32 %v41, %v113
    %v130 = vsub.f32 %v42, %v114
    %v131 = vsub.f32 %v43, %v115
    %v132 = vmul.f32 %v116, %v116
    %v133 = vmul.f32 %v117, %v117
    %v134 = vmul.f32 %v118, %v118
    %v135 = vmul.f32 %v119, %v119
    %v136 = vmul.f32 %v120, %v120
    %v137 = vmul.f32 %v121, %v121
    %v138 = vmul.f32 %v122, %v122
    %v139 = vmul.f32 %v123, %v123
    %v140 = vmul.f32 %v124, %v124
    %v141 = vmul.f32 %v125, %v125
    %v142 = vmul.f32 %v126, %v126
    %v143 = vmul.f32 %v127, %v127
    %v144 = vmul.f32 %v128, %v128
    %v145 = vmul.f32 %v129, %v129
    %v146 = vmul.f32 %v130, %v130
    %v147 = vmul.f32 %v131, %v131
    %v148 = vsel %vm44, %v132, 0.0
    %149 = vadd.xlane.f32.xlu0 %v148
    %v150 = vpop.xlane.xlu0 %149
    %v151 = vsel %vm44, %v133, 0.0
    %152 = vadd.xlane.f32.xlu0 %v151
    %v153 = vpop.xlane.xlu0 %152
    %v154 = vsel %vm44, %v134, 0.0
    %155 = vadd.xlane.f32.xlu0 %v154
    %v156 = vpop.xlane.xlu0 %155
    %v157 = vsel %vm44, %v135, 0.0
    %158 = vadd.xlane.f32.xlu0 %v157
    %v159 = vpop.xlane.xlu0 %158
    %v160 = vsel %vm44, %v136, 0.0
    %161 = vadd.xlane.f32.xlu0 %v160
    %v162 = vpop.xlane.xlu0 %161
    %v163 = vsel %vm44, %v137, 0.0
    %164 = vadd.xlane.f32.xlu0 %v163
    %v165 = vpop.xlane.xlu0 %164
    %v166 = vsel %vm44, %v138, 0.0
    %167 = vadd.xlane.f32.xlu0 %v166
    %v168 = vpop.xlane.xlu0 %167
    %v169 = vsel %vm44, %v139, 0.0
    %170 = vadd.xlane.f32.xlu0 %v169
    %v171 = vpop.xlane.xlu0 %170
    %v172 = vsel %vm44, %v140, 0.0
    %173 = vadd.xlane.f32.xlu0 %v172
    %v174 = vpop.xlane.xlu0 %173
    %v175 = vsel %vm44, %v141, 0.0
    %176 = vadd.xlane.f32.xlu0 %v175
    %v177 = vpop.xlane.xlu0 %176
    %v178 = vsel %vm44, %v142, 0.0
    %179 = vadd.xlane.f32.xlu0 %v178
    %v180 = vpop.xlane.xlu0 %179
    %v181 = vsel %vm44, %v143, 0.0
    %182 = vadd.xlane.f32.xlu0 %v181
    %v183 = vpop.xlane.xlu0 %182
    %v184 = vsel %vm44, %v144, 0.0
    %185 = vadd.xlane.f32.xlu0 %v184
    %v186 = vpop.xlane.xlu0 %185
    %v187 = vsel %vm44, %v145, 0.0
    %188 = vadd.xlane.f32.xlu0 %v187
    %v189 = vpop.xlane.xlu0 %188
    %v190 = vsel %vm44, %v146, 0.0
    %191 = vadd.xlane.f32.xlu0 %v190
    %v192 = vpop.xlane.xlu0 %191
    %v193 = vsel %vm44, %v147, 0.0
    %194 = vadd.xlane.f32.xlu0 %v193
    %v195 = vpop.xlane.xlu0 %194
    %v196 = vrsqrt.pop %v150
    %v197 = vmul.f32 %v196, %v150
    %v198 = vmul.f32 %v197, %v196
    %v199 = vmul.f32 0.5, %v198
    %v200 = vsub.f32 1.5, %v199
    %v201 = vmul.f32 %v196, %v200
    %v202 = vmul.f32 %v150, %v201
    %vm203 = vcmp.eq.f32.partialorder %v150, inf
    %v204 = vsel %vm203, %v150, %v202
    %vm205 = vcmp.eq.f32.partialorder %v150, 0.0
    %v206 = vand.u32 %v150, 2147483648
    %v207 = vsel %vm205, %v206, %v204
    %v208 = vrsqrt.pop %v153
    %v209 = vmul.f32 %v208, %v153
    %v210 = vmul.f32 %v209, %v208
    %v211 = vmul.f32 0.5, %v210
    %v212 = vsub.f32 1.5, %v211
    %v213 = vmul.f32 %v208, %v212
    %v214 = vmul.f32 %v153, %v213
    %vm215 = vcmp.eq.f32.partialorder %v153, inf
    %v216 = vsel %vm215, %v153, %v214
    %vm217 = vcmp.eq.f32.partialorder %v153, 0.0
    %v218 = vand.u32 %v153, 2147483648
    %v219 = vsel %vm217, %v218, %v216
    %v220 = vrsqrt.pop %v156
    %v221 = vmul.f32 %v220, %v156
    %v222 = vmul.f32 %v221, %v220
    %v223 = vmul.f32 0.5, %v222
    %v224 = vsub.f32 1.5, %v223
    %v225 = vmul.f32 %v220, %v224
    %v226 = vmul.f32 %v156, %v225
    %vm227 = vcmp.eq.f32.partialorder %v156, inf
    %v228 = vsel %vm227, %v156, %v226
    %vm229 = vcmp.eq.f32.partialorder %v156, 0.0
    %v230 = vand.u32 %v156, 2147483648
    %v231 = vsel %vm229, %v230, %v228
    %v232 = vrsqrt.pop %v159
    %v233 = vmul.f32 %v232, %v159
    %v234 = vmul.f32 %v233, %v232
    %v235 = vmul.f32 0.5, %v234
    %v236 = vsub.f32 1.5, %v235
    %v237 = vmul.f32 %v232, %v236
    %v238 = vmul.f32 %v159, %v237
    %vm239 = vcmp.eq.f32.partialorder %v159, inf
    %v240 = vsel %vm239, %v159, %v238
    %vm241 = vcmp.eq.f32.partialorder %v159, 0.0
    %v242 = vand.u32 %v159, 2147483648
    %v243 = vsel %vm241, %v242, %v240
    %v244 = vrsqrt.pop %v162
    %v245 = vmul.f32 %v244, %v162
    %v246 = vmul.f32 %v245, %v244
    %v247 = vmul.f32 0.5, %v246
    %v248 = vsub.f32 1.5, %v247
    %v249 = vmul.f32 %v244, %v248
    %v250 = vmul.f32 %v162, %v249
    %vm251 = vcmp.eq.f32.partialorder %v162, inf
    %v252 = vsel %vm251, %v162, %v250
    %vm253 = vcmp.eq.f32.partialorder %v162, 0.0
    %v254 = vand.u32 %v162, 2147483648
    %v255 = vsel %vm253, %v254, %v252
    %v256 = vrsqrt.pop %v165
    %v257 = vmul.f32 %v256, %v165
    %v258 = vmul.f32 %v257, %v256
    %v259 = vmul.f32 0.5, %v258
    %v260 = vsub.f32 1.5, %v259
    %v261 = vmul.f32 %v256, %v260
    %v262 = vmul.f32 %v165, %v261
    %vm263 = vcmp.eq.f32.partialorder %v165, inf
    %v264 = vsel %vm263, %v165, %v262
    %vm265 = vcmp.eq.f32.partialorder %v165, 0.0
    %v266 = vand.u32 %v165, 2147483648
    %v267 = vsel %vm265, %v266, %v264
    %v268 = vrsqrt.pop %v168
    %v269 = vmul.f32 %v268, %v168
    %v270 = vmul.f32 %v269, %v268
    %v271 = vmul.f32 0.5, %v270
    %v272 = vsub.f32 1.5, %v271
    %v273 = vmul.f32 %v268, %v272
    %v274 = vmul.f32 %v168, %v273
    %vm275 = vcmp.eq.f32.partialorder %v168, inf
    %v276 = vsel %vm275, %v168, %v274
    %vm277 = vcmp.eq.f32.partialorder %v168, 0.0
    %v278 = vand.u32 %v168, 2147483648
    %v279 = vsel %vm277, %v278, %v276
    %v280 = vrsqrt.pop %v171
    %v281 = vmul.f32 %v280, %v171
    %v282 = vmul.f32 %v281, %v280
    %v283 = vmul.f32 0.5, %v282
    %v284 = vsub.f32 1.5, %v283
    %v285 = vmul.f32 %v280, %v284
    %v286 = vmul.f32 %v171, %v285
    %vm287 = vcmp.eq.f32.partialorder %v171, inf
    %v288 = vsel %vm287, %v171, %v286
    %vm289 = vcmp.eq.f32.partialorder %v171, 0.0
    %v290 = vand.u32 %v171, 2147483648
    %v291 = vsel %vm289, %v290, %v288
    %v292 = vrsqrt.pop %v174
    %v293 = vmul.f32 %v292, %v174
    %v294 = vmul.f32 %v293, %v292
    %v295 = vmul.f32 0.5, %v294
    %v296 = vsub.f32 1.5, %v295
    %v297 = vmul.f32 %v292, %v296
    %v298 = vmul.f32 %v174, %v297
    %vm299 = vcmp.eq.f32.partialorder %v174, inf
    %v300 = vsel %vm299, %v174, %v298
    %vm301 = vcmp.eq.f32.partialorder %v174, 0.0
    %v302 = vand.u32 %v174, 2147483648
    %v303 = vsel %vm301, %v302, %v300
    %v304 = vrsqrt.pop %v177
    %v305 = vmul.f32 %v304, %v177
    %v306 = vmul.f32 %v305, %v304
    %v307 = vmul.f32 0.5, %v306
    %v308 = vsub.f32 1.5, %v307
    %v309 = vmul.f32 %v304, %v308
    %v310 = vmul.f32 %v177, %v309
    %vm311 = vcmp.eq.f32.partialorder %v177, inf
    %v312 = vsel %vm311, %v177, %v310
    %vm313 = vcmp.eq.f32.partialorder %v177, 0.0
    %v314 = vand.u32 %v177, 2147483648
    %v315 = vsel %vm313, %v314, %v312
    %v316 = vrsqrt.pop %v180
    %v317 = vmul.f32 %v316, %v180
    %v318 = vmul.f32 %v317, %v316
    %v319 = vmul.f32 0.5, %v318
    %v320 = vsub.f32 1.5, %v319
    %v321 = vmul.f32 %v316, %v320
    %v322 = vmul.f32 %v180, %v321
    %vm323 = vcmp.eq.f32.partialorder %v180, inf
    %v324 = vsel %vm323, %v180, %v322
    %vm325 = vcmp.eq.f32.partialorder %v180, 0.0
    %v326 = vand.u32 %v180, 2147483648
    %v327 = vsel %vm325, %v326, %v324
    %v328 = vrsqrt.pop %v183
    %v329 = vmul.f32 %v328, %v183
    %v330 = vmul.f32 %v329, %v328
    %v331 = vmul.f32 0.5, %v330
    %v332 = vsub.f32 1.5, %v331
    %v333 = vmul.f32 %v328, %v332
    %v334 = vmul.f32 %v183, %v333
    %vm335 = vcmp.eq.f32.partialorder %v183, inf
    %v336 = vsel %vm335, %v183, %v334
    %vm337 = vcmp.eq.f32.partialorder %v183, 0.0
    %v338 = vand.u32 %v183, 2147483648
    %v339 = vsel %vm337, %v338, %v336
    %v340 = vrsqrt.pop %v186
    %v341 = vmul.f32 %v340, %v186
    %v342 = vmul.f32 %v341, %v340
    %v343 = vmul.f32 0.5, %v342
    %v344 = vsub.f32 1.5, %v343
    %v345 = vmul.f32 %v340, %v344
    %v346 = vmul.f32 %v186, %v345
    %vm347 = vcmp.eq.f32.partialorder %v186, inf
    %v348 = vsel %vm347, %v186, %v346
    %vm349 = vcmp.eq.f32.partialorder %v186, 0.0
    %v350 = vand.u32 %v186, 2147483648
    %v351 = vsel %vm349, %v350, %v348
    %v352 = vrsqrt.pop %v189
    %v353 = vmul.f32 %v352, %v189
    %v354 = vmul.f32 %v353, %v352
    %v355 = vmul.f32 0.5, %v354
    %v356 = vsub.f32 1.5, %v355
    %v357 = vmul.f32 %v352, %v356
    %v358 = vmul.f32 %v189, %v357
    %vm359 = vcmp.eq.f32.partialorder %v189, inf
    %v360 = vsel %vm359, %v189, %v358
    %vm361 = vcmp.eq.f32.partialorder %v189, 0.0
    %v362 = vand.u32 %v189, 2147483648
    %v363 = vsel %vm361, %v362, %v360
    %v364 = vrsqrt.pop %v192
    %v365 = vmul.f32 %v364, %v192
    %v366 = vmul.f32 %v365, %v364
    %v367 = vmul.f32 0.5, %v366
    %v368 = vsub.f32 1.5, %v367
    %v369 = vmul.f32 %v364, %v368
    %v370 = vmul.f32 %v192, %v369
    %vm371 = vcmp.eq.f32.partialorder %v192, inf
    %v372 = vsel %vm371, %v192, %v370
    %vm373 = vcmp.eq.f32.partialorder %v192, 0.0
    %v374 = vand.u32 %v192, 2147483648
    %v375 = vsel %vm373, %v374, %v372
    %v376 = vrsqrt.pop %v195
    %v377 = vmul.f32 %v376, %v195
    %v378 = vmul.f32 %v377, %v376
    %v379 = vmul.f32 0.5, %v378
    %v380 = vsub.f32 1.5, %v379
    %v381 = vmul.f32 %v376, %v380
    %v382 = vmul.f32 %v195, %v381
    %vm383 = vcmp.eq.f32.partialorder %v195, inf
    %v384 = vsel %vm383, %v195, %v382
    %vm385 = vcmp.eq.f32.partialorder %v195, 0.0
    %v386 = vand.u32 %v195, 2147483648
    %v387 = vsel %vm385, %v386, %v384
    %v388 = vmax.f32 %v207, 1e-12
    %v389 = vmax.f32 %v219, 1e-12
    %v390 = vmax.f32 %v231, 1e-12
    %v391 = vmax.f32 %v243, 1e-12
    %v392 = vmax.f32 %v255, 1e-12
    %v393 = vmax.f32 %v267, 1e-12
    %v394 = vmax.f32 %v279, 1e-12
    %v395 = vmax.f32 %v291, 1e-12
    %v396 = vmax.f32 %v303, 1e-12
    %v397 = vmax.f32 %v315, 1e-12
    %v398 = vmax.f32 %v327, 1e-12
    %v399 = vmax.f32 %v339, 1e-12
    %v400 = vmax.f32 %v351, 1e-12
    %v401 = vmax.f32 %v363, 1e-12
    %v402 = vmax.f32 %v375, 1e-12
    %v403 = vmax.f32 %v387, 1e-12
    %v404 = vrcp.pop %v388
    %v405 = vmul.f32 %v388, %v404
    %v406 = vsub.f32 1.0, %v405
    %v407 = vmul.f32 %v404, %v406
    %v408 = vadd.f32 %v404, %v407
    %vm409 = vweird.f32 %v388
    %vm410 = vweird.f32 %v404
    %vm411 = vmor %vm409, %vm410
    %v412 = vsel %vm411, %v404, %v408
    %v413 = vand.u32 2147483647, %v388
    %vm414 = vcmp.eq.f32.partialorder %v413, 8.507059e+37
    %v415 = vand.u32 %v388, 2147483648
    %v416 = vor.u32 1.1754944e-38, %v415
    %v417 = vsel %vm414, %v416, %v412
    %v418 = vmul.f32 %v116, %v417
    %v419 = vrcp.pop %v389
    %v420 = vmul.f32 %v389, %v419
    %v421 = vsub.f32 1.0, %v420
    %v422 = vmul.f32 %v419, %v421
    %v423 = vadd.f32 %v419, %v422
    %vm424 = vweird.f32 %v389
    %vm425 = vweird.f32 %v419
    %vm426 = vmor %vm424, %vm425
    %v427 = vsel %vm426, %v419, %v423
    %v428 = vand.u32 2147483647, %v389
    %vm429 = vcmp.eq.f32.partialorder %v428, 8.507059e+37
    %v430 = vand.u32 %v389, 2147483648
    %v431 = vor.u32 1.1754944e-38, %v430
    %v432 = vsel %vm429, %v431, %v427
    %v433 = vmul.f32 %v117, %v432
    %v434 = vrcp.pop %v390
    %v435 = vmul.f32 %v390, %v434
    %v436 = vsub.f32 1.0, %v435
    %v437 = vmul.f32 %v434, %v436
    %v438 = vadd.f32 %v434, %v437
    %vm439 = vweird.f32 %v390
    %vm440 = vweird.f32 %v434
    %vm441 = vmor %vm439, %vm440
    %v442 = vsel %vm441, %v434, %v438
    %v443 = vand.u32 2147483647, %v390
    %vm444 = vcmp.eq.f32.partialorder %v443, 8.507059e+37
    %v445 = vand.u32 %v390, 2147483648
    %v446 = vor.u32 1.1754944e-38, %v445
    %v447 = vsel %vm444, %v446, %v442
    %v448 = vmul.f32 %v118, %v447
    %v449 = vrcp.pop %v391
    %v450 = vmul.f32 %v391, %v449
    %v451 = vsub.f32 1.0, %v450
    %v452 = vmul.f32 %v449, %v451
    %v453 = vadd.f32 %v449, %v452
    %vm454 = vweird.f32 %v391
    %vm455 = vweird.f32 %v449
    %vm456 = vmor %vm454, %vm455
    %v457 = vsel %vm456, %v449, %v453
    %v458 = vand.u32 2147483647, %v391
    %vm459 = vcmp.eq.f32.partialorder %v458, 8.507059e+37
    %v460 = vand.u32 %v391, 2147483648
    %v461 = vor.u32 1.1754944e-38, %v460
    %v462 = vsel %vm459, %v461, %v457
    %v463 = vmul.f32 %v119, %v462
    %v464 = vrcp.pop %v392
    %v465 = vmul.f32 %v392, %v464
    %v466 = vsub.f32 1.0, %v465
    %v467 = vmul.f32 %v464, %v466
    %v468 = vadd.f32 %v464, %v467
    %vm469 = vweird.f32 %v392
    %vm470 = vweird.f32 %v464
    %vm471 = vmor %vm469, %vm470
    %v472 = vsel %vm471, %v464, %v468
    %v473 = vand.u32 2147483647, %v392
    %vm474 = vcmp.eq.f32.partialorder %v473, 8.507059e+37
    %v475 = vand.u32 %v392, 2147483648
    %v476 = vor.u32 1.1754944e-38, %v475
    %v477 = vsel %vm474, %v476, %v472
    %v478 = vmul.f32 %v120, %v477
    %v479 = vrcp.pop %v393
    %v480 = vmul.f32 %v393, %v479
    %v481 = vsub.f32 1.0, %v480
    %v482 = vmul.f32 %v479, %v481
    %v483 = vadd.f32 %v479, %v482
    %vm484 = vweird.f32 %v393
    %vm485 = vweird.f32 %v479
    %vm486 = vmor %vm484, %vm485
    %v487 = vsel %vm486, %v479, %v483
    %v488 = vand.u32 2147483647, %v393
    %vm489 = vcmp.eq.f32.partialorder %v488, 8.507059e+37
    %v490 = vand.u32 %v393, 2147483648
    %v491 = vor.u32 1.1754944e-38, %v490
    %v492 = vsel %vm489, %v491, %v487
    %v493 = vmul.f32 %v121, %v492
    %v494 = vrcp.pop %v394
    %v495 = vmul.f32 %v394, %v494
    %v496 = vsub.f32 1.0, %v495
    %v497 = vmul.f32 %v494, %v496
    %v498 = vadd.f32 %v494, %v497
    %vm499 = vweird.f32 %v394
    %vm500 = vweird.f32 %v494
    %vm501 = vmor %vm499, %vm500
    %v502 = vsel %vm501, %v494, %v498
    %v503 = vand.u32 2147483647, %v394
    %vm504 = vcmp.eq.f32.partialorder %v503, 8.507059e+37
    %v505 = vand.u32 %v394, 2147483648
    %v506 = vor.u32 1.1754944e-38, %v505
    %v507 = vsel %vm504, %v506, %v502
    %v508 = vmul.f32 %v122, %v507
    %v509 = vrcp.pop %v395
    %v510 = vmul.f32 %v395, %v509
    %v511 = vsub.f32 1.0, %v510
    %v512 = vmul.f32 %v509, %v511
    %v513 = vadd.f32 %v509, %v512
    %vm514 = vweird.f32 %v395
    %vm515 = vweird.f32 %v509
    %vm516 = vmor %vm514, %vm515
    %v517 = vsel %vm516, %v509, %v513
    %v518 = vand.u32 2147483647, %v395
    %vm519 = vcmp.eq.f32.partialorder %v518, 8.507059e+37
    %v520 = vand.u32 %v395, 2147483648
    %v521 = vor.u32 1.1754944e-38, %v520
    %v522 = vsel %vm519, %v521, %v517
    %v523 = vmul.f32 %v123, %v522
    %v524 = vrcp.pop %v396
    %v525 = vmul.f32 %v396, %v524
    %v526 = vsub.f32 1.0, %v525
    %v527 = vmul.f32 %v524, %v526
    %v528 = vadd.f32 %v524, %v527
    %vm529 = vweird.f32 %v396
    %vm530 = vweird.f32 %v524
    %vm531 = vmor %vm529, %vm530
    %v532 = vsel %vm531, %v524, %v528
    %v533 = vand.u32 2147483647, %v396
    %vm534 = vcmp.eq.f32.partialorder %v533, 8.507059e+37
    %v535 = vand.u32 %v396, 2147483648
    %v536 = vor.u32 1.1754944e-38, %v535
    %v537 = vsel %vm534, %v536, %v532
    %v538 = vmul.f32 %v124, %v537
    %v539 = vrcp.pop %v397
    %v540 = vmul.f32 %v397, %v539
    %v541 = vsub.f32 1.0, %v540
    %v542 = vmul.f32 %v539, %v541
    %v543 = vadd.f32 %v539, %v542
    %vm544 = vweird.f32 %v397
    %vm545 = vweird.f32 %v539
    %vm546 = vmor %vm544, %vm545
    %v547 = vsel %vm546, %v539, %v543
    %v548 = vand.u32 2147483647, %v397
    %vm549 = vcmp.eq.f32.partialorder %v548, 8.507059e+37
    %v550 = vand.u32 %v397, 2147483648
    %v551 = vor.u32 1.1754944e-38, %v550
    %v552 = vsel %vm549, %v551, %v547
    %v553 = vmul.f32 %v125, %v552
    %v554 = vrcp.pop %v398
    %v555 = vmul.f32 %v398, %v554
    %v556 = vsub.f32 1.0, %v555
    %v557 = vmul.f32 %v554, %v556
    %v558 = vadd.f32 %v554, %v557
    %vm559 = vweird.f32 %v398
    %vm560 = vweird.f32 %v554
    %vm561 = vmor %vm559, %vm560
    %v562 = vsel %vm561, %v554, %v558
    %v563 = vand.u32 2147483647, %v398
    %vm564 = vcmp.eq.f32.partialorder %v563, 8.507059e+37
    %v565 = vand.u32 %v398, 2147483648
    %v566 = vor.u32 1.1754944e-38, %v565
    %v567 = vsel %vm564, %v566, %v562
    %v568 = vmul.f32 %v126, %v567
    %v569 = vrcp.pop %v399
    %v570 = vmul.f32 %v399, %v569
    %v571 = vsub.f32 1.0, %v570
    %v572 = vmul.f32 %v569, %v571
    %v573 = vadd.f32 %v569, %v572
    %vm574 = vweird.f32 %v399
    %vm575 = vweird.f32 %v569
    %vm576 = vmor %vm574, %vm575
    %v577 = vsel %vm576, %v569, %v573
    %v578 = vand.u32 2147483647, %v399
    %vm579 = vcmp.eq.f32.partialorder %v578, 8.507059e+37
    %v580 = vand.u32 %v399, 2147483648
    %v581 = vor.u32 1.1754944e-38, %v580
    %v582 = vsel %vm579, %v581, %v577
    %v583 = vmul.f32 %v127, %v582
    %v584 = vrcp.pop %v400
    %v585 = vmul.f32 %v400, %v584
    %v586 = vsub.f32 1.0, %v585
    %v587 = vmul.f32 %v584, %v586
    %v588 = vadd.f32 %v584, %v587
    %vm589 = vweird.f32 %v400
    %vm590 = vweird.f32 %v584
    %vm591 = vmor %vm589, %vm590
    %v592 = vsel %vm591, %v584, %v588
    %v593 = vand.u32 2147483647, %v400
    %vm594 = vcmp.eq.f32.partialorder %v593, 8.507059e+37
    %v595 = vand.u32 %v400, 2147483648
    %v596 = vor.u32 1.1754944e-38, %v595
    %v597 = vsel %vm594, %v596, %v592
    %v598 = vmul.f32 %v128, %v597
    %v599 = vrcp.pop %v401
    %v600 = vmul.f32 %v401, %v599
    %v601 = vsub.f32 1.0, %v600
    %v602 = vmul.f32 %v599, %v601
    %v603 = vadd.f32 %v599, %v602
    %vm604 = vweird.f32 %v401
    %vm605 = vweird.f32 %v599
    %vm606 = vmor %vm604, %vm605
    %v607 = vsel %vm606, %v599, %v603
    %v608 = vand.u32 2147483647, %v401
    %vm609 = vcmp.eq.f32.partialorder %v608, 8.507059e+37
    %v610 = vand.u32 %v401, 2147483648
    %v611 = vor.u32 1.1754944e-38, %v610
    %v612 = vsel %vm609, %v611, %v607
    %v613 = vmul.f32 %v129, %v612
    %v614 = vrcp.pop %v402
    %v615 = vmul.f32 %v402, %v614
    %v616 = vsub.f32 1.0, %v615
    %v617 = vmul.f32 %v614, %v616
    %v618 = vadd.f32 %v614, %v617
    %vm619 = vweird.f32 %v402
    %vm620 = vweird.f32 %v614
    %vm621 = vmor %vm619, %vm620
    %v622 = vsel %vm621, %v614, %v618
    %v623 = vand.u32 2147483647, %v402
    %vm624 = vcmp.eq.f32.partialorder %v623, 8.507059e+37
    %v625 = vand.u32 %v402, 2147483648
    %v626 = vor.u32 1.1754944e-38, %v625
    %v627 = vsel %vm624, %v626, %v622
    %v628 = vmul.f32 %v130, %v627
    %v629 = vrcp.pop %v403
    %v630 = vmul.f32 %v403, %v629
    %v631 = vsub.f32 1.0, %v630
    %v632 = vmul.f32 %v629, %v631
    %v633 = vadd.f32 %v629, %v632
    %vm634 = vweird.f32 %v403
    %vm635 = vweird.f32 %v629
    %vm636 = vmor %vm634, %vm635
    %v637 = vsel %vm636, %v629, %v633
    %v638 = vand.u32 2147483647, %v403
    %vm639 = vcmp.eq.f32.partialorder %v638, 8.507059e+37
    %v640 = vand.u32 %v403, 2147483648
    %v641 = vor.u32 1.1754944e-38, %v640
    %v642 = vsel %vm639, %v641, %v637
    %v643 = vmul.f32 %v131, %v642
    %v644 = vld [vmem:[%s1] sm:$0xff]
    %v645 = vld [vmem:[%s1 + $0x8] sm:$0xff]
    %v646 = vld [vmem:[%s1 + $0x10] sm:$0xff]
    %v647 = vld [vmem:[%s1 + $0x18] sm:$0xff]
    %v648 = vadd.f32 %v644, %v645
    %v649 = vadd.f32 %v648, %v646
    %v650 = vadd.f32 %v649, %v647
    %v651 = vrot.slane %v650, 4
    %v652 = vadd.f32 %v650, %v651
    %v653 = vrot.slane %v652, 2
    %v654 = vadd.f32 %v652, %v653
    %v655 = vrot.slane %v654, 1
    %v656 = vadd.f32 %v654, %v655
    %v657 = vmul.f32 %v656, %v99
    %v658 = vsub.f32 %v644, %v657
    %v659 = vsub.f32 %v645, %v657
    %v660 = vsub.f32 %v646, %v657
    %v661 = vsub.f32 %v647, %v657
    %v662 = vmul.f32 %v658, %v658
    %v663 = vmul.f32 %v659, %v659
    %v664 = vmul.f32 %v660, %v660
    %v665 = vmul.f32 %v661, %v661
    %v666 = vadd.f32 %v662, %v663
    %v667 = vadd.f32 %v666, %v664
    %v668 = vadd.f32 %v667, %v665
    %v669 = vrot.slane %v668, 4
    %v670 = vadd.f32 %v668, %v669
    %v671 = vrot.slane %v670, 2
    %v672 = vadd.f32 %v670, %v671
    %v673 = vrot.slane %v672, 1
    %v674 = vadd.f32 %v672, %v673
    %v675 = vrsqrt.pop %v674
    %v676 = vmul.f32 %v675, %v674
    %v677 = vmul.f32 %v676, %v675
    %v678 = vmul.f32 0.5, %v677
    %v679 = vsub.f32 1.5, %v678
    %v680 = vmul.f32 %v675, %v679
    %v681 = vmul.f32 %v674, %v680
    %vm682 = vcmp.eq.f32.partialorder %v674, inf
    %v683 = vsel %vm682, %v674, %v681
    %vm684 = vcmp.eq.f32.partialorder %v674, 0.0
    %v685 = vand.u32 %v674, 2147483648
    %v686 = vsel %vm684, %v685, %v683
    %v687 = vmax.f32 %v686, 1e-12
    %v688 = vrcp.pop %v687
    %v689 = vmul.f32 %v687, %v688
    %v690 = vsub.f32 1.0, %v689
    %v691 = vmul.f32 %v688, %v690
    %v692 = vadd.f32 %v688, %v691
    %vm693 = vweird.f32 %v687
    %vm694 = vweird.f32 %v688
    %vm695 = vmor %vm693, %vm694
    %v696 = vsel %vm695, %v688, %v692
    %v697 = vand.u32 2147483647, %v687
    %vm698 = vcmp.eq.f32.partialorder %v697, 8.507059e+37
    %v699 = vand.u32 %v687, 2147483648
    %v700 = vor.u32 1.1754944e-38, %v699
    %v701 = vsel %vm698, %v700, %v696
    %v702 = vmul.f32 %v658, %v701
    %v703 = vmul.f32 %v659, %v701
    %v704 = vmul.f32 %v660, %v701
    %v705 = vmul.f32 %v661, %v701
    %v706 = vpack.c.bf16 %v433, %v418
    %v707 = vpack.c.bf16 %v463, %v448
    %v708 = vpack.c.bf16 %v493, %v478
    %v709 = vpack.c.bf16 %v523, %v508
    %v710 = vpack.c.bf16 %v553, %v538
    %v711 = vpack.c.bf16 %v583, %v568
    %v712 = vpack.c.bf16 %v613, %v598
    %v713 = vpack.c.bf16 %v643, %v628
    %v714 = vld [vmem:[%s3] sm:$0xf]
    %v715 = vld [vmem:[%s3 + $0x4] sm:$0xf]
    %v716 = vld [vmem:[%s3 + $0x8] sm:$0xf]
    %v717 = vld [vmem:[%s3 + $0xc] sm:$0xf]
    %v722 = vunpack.c.l.b16 %v714
    %v723 = vunpack.c.l.b16 %v715
    %v724 = vunpack.c.l.b16 %v716
    %v725 = vunpack.c.l.b16 %v717
    %v726 = vpack.c.b16 %v723, %v722
    %v727 = vpack.c.b16 %v725, %v724
    %v731 = vsel %vm44, %v706, 0
    %v734 = vsel %vm44, %v707, 0
    %v737 = vsel %vm44, %v708, 0
    %v740 = vsel %vm44, %v709, 0
    %v743 = vsel %vm44, %v710, 0
    %v746 = vsel %vm44, %v711, 0
    %v749 = vsel %vm44, %v712, 0
    %v752 = vsel %vm44, %v713, 0
    %754 = vmatpush.bf16.msra.mxu0 0
    %755 = vmatpush.bf16.msra.mxu0 0
    %756 = vmatpush.bf16.msra.mxu0 0
    %757 = vmatpush.bf16.msra.mxu0 0
    %758 = vmatpush.bf16.msra.mxu0 0
    %759 = vmatpush.bf16.msra.mxu0 0
    %760 = vmatpush.bf16.msra.mxu0 %v727
    %761 = vmatpush.bf16.msra.mxu0 %v726
    %762 = vmatmul.bf16.gmra.mxu0 %v731
    %v763 = vpop.f32.mrf.mxu0
    %v764 = vadd.f32 0.0, %v763
    %v765 = vpop.f32.mrf.mxu0
    %v766 = vadd.f32 0.0, %v765
    %767 = vmatmul.bf16.gmra.mxu0 %v734
    %v768 = vpop.f32.mrf.mxu0
    %v769 = vadd.f32 0.0, %v768
    %v770 = vpop.f32.mrf.mxu0
    %v771 = vadd.f32 0.0, %v770
    %772 = vmatmul.bf16.gmra.mxu0 %v737
    %v773 = vpop.f32.mrf.mxu0
    %v774 = vadd.f32 0.0, %v773
    %v775 = vpop.f32.mrf.mxu0
    %v776 = vadd.f32 0.0, %v775
    %777 = vmatmul.bf16.gmra.mxu0 %v740
    %v778 = vpop.f32.mrf.mxu0
    %v779 = vadd.f32 0.0, %v778
    %v780 = vpop.f32.mrf.mxu0
    %v781 = vadd.f32 0.0, %v780
    %782 = vmatmul.bf16.gmra.mxu0 %v743
    %v783 = vpop.f32.mrf.mxu0
    %v784 = vadd.f32 0.0, %v783
    %v785 = vpop.f32.mrf.mxu0
    %v786 = vadd.f32 0.0, %v785
    %787 = vmatmul.bf16.gmra.mxu0 %v746
    %v788 = vpop.f32.mrf.mxu0
    %v789 = vadd.f32 0.0, %v788
    %v790 = vpop.f32.mrf.mxu0
    %v791 = vadd.f32 0.0, %v790
    %792 = vmatmul.bf16.gmra.mxu0 %v749
    %v793 = vpop.f32.mrf.mxu0
    %v794 = vadd.f32 0.0, %v793
    %v795 = vpop.f32.mrf.mxu0
    %v796 = vadd.f32 0.0, %v795
    %797 = vmatmul.bf16.gmra.mxu0 %v752
    %v798 = vpop.f32.mrf.mxu0
    %v799 = vadd.f32 0.0, %v798
    %v800 = vpop.f32.mrf.mxu0
    %v801 = vadd.f32 0.0, %v800
    %802 = vdwg.mxu0
    %v803 = vld [vmem:[%s4] sm:$0xf]
    %v804 = vld [vmem:[%s4 + $0x4] sm:$0xf]
    %v805 = vld [vmem:[%s4 + $0x8] sm:$0xf]
    %v806 = vld [vmem:[%s4 + $0xc] sm:$0xf]
    %v811 = vunpack.c.l.b16 %v803
    %v812 = vunpack.c.l.b16 %v804
    %v813 = vunpack.c.l.b16 %v805
    %v814 = vunpack.c.l.b16 %v806
    %v815 = vpack.c.b16 %v812, %v811
    %v816 = vpack.c.b16 %v814, %v813
    %819 = vmatpush.bf16.msra.mxu0 0
    %820 = vmatpush.bf16.msra.mxu0 0
    %821 = vmatpush.bf16.msra.mxu0 0
    %822 = vmatpush.bf16.msra.mxu0 0
    %823 = vmatpush.bf16.msra.mxu0 0
    %824 = vmatpush.bf16.msra.mxu0 0
    %825 = vmatpush.bf16.msra.mxu0 %v816
    %826 = vmatpush.bf16.msra.mxu0 %v815
    %827 = vmatmul.bf16.gmra.mxu0 %v731
    %v828 = vpop.f32.mrf.mxu0
    %v829 = vadd.f32 0.0, %v828
    %v830 = vpop.f32.mrf.mxu0
    %v831 = vadd.f32 0.0, %v830
    %832 = vmatmul.bf16.gmra.mxu0 %v734
    %v833 = vpop.f32.mrf.mxu0
    %v834 = vadd.f32 0.0, %v833
    %v835 = vpop.f32.mrf.mxu0
    %v836 = vadd.f32 0.0, %v835
    %837 = vmatmul.bf16.gmra.mxu0 %v737
    %v838 = vpop.f32.mrf.mxu0
    %v839 = vadd.f32 0.0, %v838
    %v840 = vpop.f32.mrf.mxu0
    %v841 = vadd.f32 0.0, %v840
    %842 = vmatmul.bf16.gmra.mxu0 %v740
    %v843 = vpop.f32.mrf.mxu0
    %v844 = vadd.f32 0.0, %v843
    %v845 = vpop.f32.mrf.mxu0
    %v846 = vadd.f32 0.0, %v845
    %847 = vmatmul.bf16.gmra.mxu0 %v743
    %v848 = vpop.f32.mrf.mxu0
    %v849 = vadd.f32 0.0, %v848
    %v850 = vpop.f32.mrf.mxu0
    %v851 = vadd.f32 0.0, %v850
    %852 = vmatmul.bf16.gmra.mxu0 %v746
    %v853 = vpop.f32.mrf.mxu0
    %v854 = vadd.f32 0.0, %v853
    %v855 = vpop.f32.mrf.mxu0
    %v856 = vadd.f32 0.0, %v855
    %857 = vmatmul.bf16.gmra.mxu0 %v749
    %v858 = vpop.f32.mrf.mxu0
    %v859 = vadd.f32 0.0, %v858
    %v860 = vpop.f32.mrf.mxu0
    %v861 = vadd.f32 0.0, %v860
    %862 = vmatmul.bf16.gmra.mxu0 %v752
    %v863 = vpop.f32.mrf.mxu0
    %v864 = vadd.f32 0.0, %v863
    %v865 = vpop.f32.mrf.mxu0
    %v866 = vadd.f32 0.0, %v865
    %867 = vdwg.mxu0
    %v868 = vpack.c.bf16 %v766, %v764
    %v869 = vpack.c.bf16 %v771, %v769
    %v870 = vpack.c.bf16 %v776, %v774
    %v871 = vpack.c.bf16 %v781, %v779
    %v872 = vpack.c.bf16 %v786, %v784
    %v873 = vpack.c.bf16 %v791, %v789
    %v874 = vpack.c.bf16 %v796, %v794
    %v875 = vpack.c.bf16 %v801, %v799
    %v876 = vpack.c.bf16 %v831, %v829
    %v877 = vpack.c.bf16 %v836, %v834
    %v878 = vpack.c.bf16 %v841, %v839
    %v879 = vpack.c.bf16 %v846, %v844
    %v880 = vpack.c.bf16 %v851, %v849
    %v881 = vpack.c.bf16 %v856, %v854
    %v882 = vpack.c.bf16 %v861, %v859
    %v883 = vpack.c.bf16 %v866, %v864
    %vm884 = vcmask 523264
    %v886 = vsel %vm884, %v868, 0
    %v889 = vsel %vm884, %v869, 0
    %v892 = vsel %vm884, %v870, 0
    %v895 = vsel %vm884, %v871, 0
    %v898 = vsel %vm884, %v872, 0
    %v901 = vsel %vm884, %v873, 0
    %v904 = vsel %vm884, %v874, 0
    %v907 = vsel %vm884, %v875, 0
    %v910 = vsel %vm884, %v876, 0
    %v913 = vsel %vm884, %v877, 0
    %v916 = vsel %vm884, %v878, 0
    %v919 = vsel %vm884, %v879, 0
    %v922 = vsel %vm884, %v880, 0
    %v925 = vsel %vm884, %v881, 0
    %v928 = vsel %vm884, %v882, 0
    %v931 = vsel %vm884, %v883, 0
    %933 = vmatpush.bf16.xpose.msra.mxu0 %v931
    %934 = vmatpush.bf16.xpose.msra.mxu0 %v928
    %935 = vmatpush.bf16.xpose.msra.mxu0 %v925
    %936 = vmatpush.bf16.xpose.msra.mxu0 %v922
    %937 = vmatpush.bf16.xpose.msra.mxu0 %v919
    %938 = vmatpush.bf16.xpose.msra.mxu0 %v916
    %939 = vmatpush.bf16.xpose.msra.mxu0 %v913
    %940 = vmatpush.bf16.xpose.msra.mxu0 %v910
    %941 = vmatmul.bf16.gmra.mxu0 %v886
    %v942 = vpop.f32.mrf.mxu0
    %v943 = vadd.f32 0.0, %v942
    %v944 = vpop.f32.mrf.mxu0
    %v945 = vadd.f32 0.0, %v944
    %946 = vmatmul.bf16.gmra.mxu0 %v889
    %v947 = vpop.f32.mrf.mxu0
    %v948 = vadd.f32 0.0, %v947
    %v949 = vpop.f32.mrf.mxu0
    %v950 = vadd.f32 0.0, %v949
    %951 = vmatmul.bf16.gmra.mxu0 %v892
    %v952 = vpop.f32.mrf.mxu0
    %v953 = vadd.f32 0.0, %v952
    %v954 = vpop.f32.mrf.mxu0
    %v955 = vadd.f32 0.0, %v954
    %956 = vmatmul.bf16.gmra.mxu0 %v895
    %v957 = vpop.f32.mrf.mxu0
    %v958 = vadd.f32 0.0, %v957
    %v959 = vpop.f32.mrf.mxu0
    %v960 = vadd.f32 0.0, %v959
    %961 = vmatmul.bf16.gmra.mxu0 %v898
    %v962 = vpop.f32.mrf.mxu0
    %v963 = vadd.f32 0.0, %v962
    %v964 = vpop.f32.mrf.mxu0
    %v965 = vadd.f32 0.0, %v964
    %966 = vmatmul.bf16.gmra.mxu0 %v901
    %v967 = vpop.f32.mrf.mxu0
    %v968 = vadd.f32 0.0, %v967
    %v969 = vpop.f32.mrf.mxu0
    %v970 = vadd.f32 0.0, %v969
    %971 = vmatmul.bf16.gmra.mxu0 %v904
    %v972 = vpop.f32.mrf.mxu0
    %v973 = vadd.f32 0.0, %v972
    %v974 = vpop.f32.mrf.mxu0
    %v975 = vadd.f32 0.0, %v974
    %976 = vmatmul.bf16.gmra.mxu0 %v907
    %v977 = vpop.f32.mrf.mxu0
    %v978 = vadd.f32 0.0, %v977
    %v979 = vpop.f32.mrf.mxu0
    %v980 = vadd.f32 0.0, %v979
    %981 = vdwg.mxu0
    %v982 = vld [vmem:[%s2] sm:$0xff]
    %v983 = vld [vmem:[%s2 + $0x8] sm:$0xff]
    %v984 = vld [vmem:[%s2 + $0x10] sm:$0xff]
    %v985 = vld [vmem:[%s2 + $0x18] sm:$0xff]
    %vm986 = vnez %v982
    %vm987 = vnez %v983
    %vm988 = vnez %v984
    %vm989 = vnez %v985
    %v990 = vsel %vm986, 16843009, 0
    %v991 = vsel %vm987, 16843009, 0
    %v992 = vsel %vm988, 16843009, 0
    %v993 = vsel %vm989, 16843009, 0
    %v994 = vunpack.c.0.s8 %v990
    %v995 = vunpack.c.1.s8 %v990
    %v996 = vunpack.c.2.s8 %v990
    %v997 = vunpack.c.3.s8 %v990
    %v998 = vunpack.c.0.s8 %v991
    %v999 = vunpack.c.1.s8 %v991
    %v1000 = vunpack.c.2.s8 %v991
    %v1001 = vunpack.c.3.s8 %v991
    %v1002 = vunpack.c.0.s8 %v992
    %v1003 = vunpack.c.1.s8 %v992
    %v1004 = vunpack.c.2.s8 %v992
    %v1005 = vunpack.c.3.s8 %v992
    %v1006 = vunpack.c.0.s8 %v993
    %v1007 = vunpack.c.1.s8 %v993
    %v1008 = vunpack.c.2.s8 %v993
    %v1009 = vunpack.c.3.s8 %v993
    %v1010 = vpack.c.b16 %v994, %v994
    %v1011 = vpack.c.b8 %v1010, %v1010
    %v1012 = vpack.c.b16 %v995, %v995
    %v1013 = vpack.c.b8 %v1012, %v1012
    %v1014 = vpack.c.b16 %v996, %v996
    %v1015 = vpack.c.b8 %v1014, %v1014
    %v1016 = vpack.c.b16 %v997, %v997
    %v1017 = vpack.c.b8 %v1016, %v1016
    %v1018 = vpack.c.b16 %v998, %v998
    %v1019 = vpack.c.b8 %v1018, %v1018
    %v1020 = vpack.c.b16 %v999, %v999
    %v1021 = vpack.c.b8 %v1020, %v1020
    %v1022 = vpack.c.b16 %v1000, %v1000
    %v1023 = vpack.c.b8 %v1022, %v1022
    %v1024 = vpack.c.b16 %v1001, %v1001
    %v1025 = vpack.c.b8 %v1024, %v1024
    %v1026 = vpack.c.b16 %v1002, %v1002
    %v1027 = vpack.c.b8 %v1026, %v1026
    %v1028 = vpack.c.b16 %v1003, %v1003
    %v1029 = vpack.c.b8 %v1028, %v1028
    %v1030 = vpack.c.b16 %v1004, %v1004
    %v1031 = vpack.c.b8 %v1030, %v1030
    %v1032 = vpack.c.b16 %v1005, %v1005
    %v1033 = vpack.c.b8 %v1032, %v1032
    %v1034 = vpack.c.b16 %v1006, %v1006
    %v1035 = vpack.c.b8 %v1034, %v1034
    %v1036 = vpack.c.b16 %v1007, %v1007
    %v1037 = vpack.c.b8 %v1036, %v1036
    %v1038 = vpack.c.b16 %v1008, %v1008
    %v1039 = vpack.c.b8 %v1038, %v1038
    %v1040 = vpack.c.b16 %v1009, %v1009
    %v1041 = vpack.c.b8 %v1040, %v1040
    %vm1042 = vnez %v1011
    %vm1043 = vnez %v1013
    %vm1044 = vnez %v1015
    %vm1045 = vnez %v1017
    %vm1046 = vnez %v1019
    %vm1047 = vnez %v1021
    %vm1048 = vnez %v1023
    %vm1049 = vnez %v1025
    %vm1050 = vnez %v1027
    %vm1051 = vnez %v1029
    %vm1052 = vnez %v1031
    %vm1053 = vnez %v1033
    %vm1054 = vnez %v1035
    %vm1055 = vnez %v1037
    %vm1056 = vnez %v1039
    %vm1057 = vnez %v1041
    %v1058 = vsel %vm1042, 16843009, 0
    %v1059 = vsel %vm1043, 16843009, 0
    %v1060 = vsel %vm1044, 16843009, 0
    %v1061 = vsel %vm1045, 16843009, 0
    %v1062 = vsel %vm1046, 16843009, 0
    %v1063 = vsel %vm1047, 16843009, 0
    %v1064 = vsel %vm1048, 16843009, 0
    %v1065 = vsel %vm1049, 16843009, 0
    %v1066 = vsel %vm1050, 16843009, 0
    %v1067 = vsel %vm1051, 16843009, 0
    %v1068 = vsel %vm1052, 16843009, 0
    %v1069 = vsel %vm1053, 16843009, 0
    %v1070 = vsel %vm1054, 16843009, 0
    %v1071 = vsel %vm1055, 16843009, 0
    %v1072 = vsel %vm1056, 16843009, 0
    %v1073 = vsel %vm1057, 16843009, 0
    %v1074 = vunpack.c.0.s8 %v1058
    %v1075 = vunpack.c.0.s8 %v1059
    %v1076 = vunpack.c.0.s8 %v1060
    %v1077 = vunpack.c.0.s8 %v1061
    %v1078 = vunpack.c.0.s8 %v1062
    %v1079 = vunpack.c.0.s8 %v1063
    %v1080 = vunpack.c.0.s8 %v1064
    %v1081 = vunpack.c.0.s8 %v1065
    %v1082 = vunpack.c.0.s8 %v1066
    %v1083 = vunpack.c.0.s8 %v1067
    %v1084 = vunpack.c.0.s8 %v1068
    %v1085 = vunpack.c.0.s8 %v1069
    %v1086 = vunpack.c.0.s8 %v1070
    %v1087 = vunpack.c.0.s8 %v1071
    %v1088 = vunpack.c.0.s8 %v1072
    %v1089 = vunpack.c.0.s8 %v1073
    %vm1090 = vcmp.ne.s32.totalorder %v1074, 0
    %vm1091 = vcmp.ne.s32.totalorder %v1075, 0
    %vm1092 = vcmp.ne.s32.totalorder %v1076, 0
    %vm1093 = vcmp.ne.s32.totalorder %v1077, 0
    %vm1094 = vcmp.ne.s32.totalorder %v1078, 0
    %vm1095 = vcmp.ne.s32.totalorder %v1079, 0
    %vm1096 = vcmp.ne.s32.totalorder %v1080, 0
    %vm1097 = vcmp.ne.s32.totalorder %v1081, 0
    %vm1098 = vcmp.ne.s32.totalorder %v1082, 0
    %vm1099 = vcmp.ne.s32.totalorder %v1083, 0
    %vm1100 = vcmp.ne.s32.totalorder %v1084, 0
    %vm1101 = vcmp.ne.s32.totalorder %v1085, 0
    %vm1102 = vcmp.ne.s32.totalorder %v1086, 0
    %vm1103 = vcmp.ne.s32.totalorder %v1087, 0
    %vm1104 = vcmp.ne.s32.totalorder %v1088, 0
    %vm1105 = vcmp.ne.s32.totalorder %v1089, 0
    %v1106 = vsel %vm1090, %v943, -1e+30
    %v1107 = vsel %vm1091, %v945, -1e+30
    %v1108 = vsel %vm1092, %v948, -1e+30
    %v1109 = vsel %vm1093, %v950, -1e+30
    %v1110 = vsel %vm1094, %v953, -1e+30
    %v1111 = vsel %vm1095, %v955, -1e+30
    %v1112 = vsel %vm1096, %v958, -1e+30
    %v1113 = vsel %vm1097, %v960, -1e+30
    %v1114 = vsel %vm1098, %v963, -1e+30
    %v1115 = vsel %vm1099, %v965, -1e+30
    %v1116 = vsel %vm1100, %v968, -1e+30
    %v1117 = vsel %vm1101, %v970, -1e+30
    %v1118 = vsel %vm1102, %v973, -1e+30
    %v1119 = vsel %vm1103, %v975, -1e+30
    %v1120 = vsel %vm1104, %v978, -1e+30
    %v1121 = vsel %vm1105, %v980, -1e+30
    %v1122 = vmax.f32 %v1106, %v1110
    %v1123 = vmax.f32 %v1107, %v1111
    %v1124 = vmax.f32 %v1108, %v1112
    %v1125 = vmax.f32 %v1109, %v1113
    %v1126 = vmax.f32 %v1122, %v1114
    %v1127 = vmax.f32 %v1123, %v1115
    %v1128 = vmax.f32 %v1124, %v1116
    %v1129 = vmax.f32 %v1125, %v1117
    %v1130 = vmax.f32 %v1126, %v1118
    %v1131 = vmax.f32 %v1127, %v1119
    %v1132 = vmax.f32 %v1128, %v1120
    %v1133 = vmax.f32 %v1129, %v1121
    %v1134 = vmax.f32 %v1130, %v1131
    %v1135 = vmax.f32 %v1132, %v1133
    %v1136 = vmax.f32 %v1134, %v1135
    %v1137 = vrot.slane %v1136, 4
    %v1138 = vmax.f32 %v1136, %v1137
    %v1139 = vrot.slane %v1138, 2
    %v1140 = vmax.f32 %v1138, %v1139
    %v1141 = vrot.slane %v1140, 1
    %v1142 = vmax.f32 %v1140, %v1141
    %v1143 = vmax.f32 %v1142, -1e+28
    %v1144 = vsub.f32 %v1106, %v1143
    %v1145 = vsub.f32 %v1107, %v1143
    %v1146 = vsub.f32 %v1108, %v1143
    %v1147 = vsub.f32 %v1109, %v1143
    %v1148 = vsub.f32 %v1110, %v1143
    %v1149 = vsub.f32 %v1111, %v1143
    %v1150 = vsub.f32 %v1112, %v1143
    %v1151 = vsub.f32 %v1113, %v1143
    %v1152 = vsub.f32 %v1114, %v1143
    %v1153 = vsub.f32 %v1115, %v1143
    %v1154 = vsub.f32 %v1116, %v1143
    %v1155 = vsub.f32 %v1117, %v1143
    %v1156 = vsub.f32 %v1118, %v1143
    %v1157 = vsub.f32 %v1119, %v1143
    %v1158 = vsub.f32 %v1120, %v1143
    %v1159 = vsub.f32 %v1121, %v1143
    %v1160 = vmul.f32 %v1144, 1.442695
    %v1161 = vpow.pop %v1160
    %v1162 = vmul.f32 %v1145, 1.442695
    %v1163 = vpow.pop %v1162
    %v1164 = vmul.f32 %v1146, 1.442695
    %v1165 = vpow.pop %v1164
    %v1166 = vmul.f32 %v1147, 1.442695
    %v1167 = vpow.pop %v1166
    %v1168 = vmul.f32 %v1148, 1.442695
    %v1169 = vpow.pop %v1168
    %v1170 = vmul.f32 %v1149, 1.442695
    %v1171 = vpow.pop %v1170
    %v1172 = vmul.f32 %v1150, 1.442695
    %v1173 = vpow.pop %v1172
    %v1174 = vmul.f32 %v1151, 1.442695
    %v1175 = vpow.pop %v1174
    %v1176 = vmul.f32 %v1152, 1.442695
    %v1177 = vpow.pop %v1176
    %v1178 = vmul.f32 %v1153, 1.442695
    %v1179 = vpow.pop %v1178
    %v1180 = vmul.f32 %v1154, 1.442695
    %v1181 = vpow.pop %v1180
    %v1182 = vmul.f32 %v1155, 1.442695
    %v1183 = vpow.pop %v1182
    %v1184 = vmul.f32 %v1156, 1.442695
    %v1185 = vpow.pop %v1184
    %v1186 = vmul.f32 %v1157, 1.442695
    %v1187 = vpow.pop %v1186
    %v1188 = vmul.f32 %v1158, 1.442695
    %v1189 = vpow.pop %v1188
    %v1190 = vmul.f32 %v1159, 1.442695
    %v1191 = vpow.pop %v1190
    %v1192 = vadd.f32 %v1161, %v1163
    %v1193 = vadd.f32 %v1192, %v1165
    %v1194 = vadd.f32 %v1193, %v1167
    %v1195 = vadd.f32 %v1194, %v1169
    %v1196 = vadd.f32 %v1195, %v1171
    %v1197 = vadd.f32 %v1196, %v1173
    %v1198 = vadd.f32 %v1197, %v1175
    %v1199 = vadd.f32 %v1198, %v1177
    %v1200 = vadd.f32 %v1199, %v1179
    %v1201 = vadd.f32 %v1200, %v1181
    %v1202 = vadd.f32 %v1201, %v1183
    %v1203 = vadd.f32 %v1202, %v1185
    %v1204 = vadd.f32 %v1203, %v1187
    %v1205 = vadd.f32 %v1204, %v1189
    %v1206 = vadd.f32 %v1205, %v1191
    %v1207 = vrot.slane %v1206, 4
    %v1208 = vadd.f32 %v1206, %v1207
    %v1209 = vrot.slane %v1208, 2
    %v1210 = vadd.f32 %v1208, %v1209
    %v1211 = vrot.slane %v1210, 1
    %v1212 = vadd.f32 %v1210, %v1211
    %v1213 = vmax.f32 %v1212, 1e-12
    %v1214 = vrcp.pop %v1213
    %v1215 = vmul.f32 %v1213, %v1214
    %v1216 = vsub.f32 1.0, %v1215
    %v1217 = vmul.f32 %v1214, %v1216
    %v1218 = vadd.f32 %v1214, %v1217
    %vm1219 = vweird.f32 %v1213
    %vm1220 = vweird.f32 %v1214
    %vm1221 = vmor %vm1219, %vm1220
    %v1222 = vsel %vm1221, %v1214, %v1218
    %v1223 = vand.u32 2147483647, %v1213
    %vm1224 = vcmp.eq.f32.partialorder %v1223, 8.507059e+37
    %v1225 = vand.u32 %v1213, 2147483648
    %v1226 = vor.u32 1.1754944e-38, %v1225
    %v1227 = vsel %vm1224, %v1226, %v1222
    %v1228 = vmul.f32 1.0, %v1227
    %v1229 = vmul.f32 %v1161, %v1228
    %v1230 = vmul.f32 %v1163, %v1228
    %v1231 = vmul.f32 %v1165, %v1228
    %v1232 = vmul.f32 %v1167, %v1228
    %v1233 = vmul.f32 %v1169, %v1228
    %v1234 = vmul.f32 %v1171, %v1228
    %v1235 = vmul.f32 %v1173, %v1228
    %v1236 = vmul.f32 %v1175, %v1228
    %v1237 = vmul.f32 %v1177, %v1228
    %v1238 = vmul.f32 %v1179, %v1228
    %v1239 = vmul.f32 %v1181, %v1228
    %v1240 = vmul.f32 %v1183, %v1228
    %v1241 = vmul.f32 %v1185, %v1228
    %v1242 = vmul.f32 %v1187, %v1228
    %v1243 = vmul.f32 %v1189, %v1228
    %v1244 = vmul.f32 %v1191, %v1228
    %v1245 = vlaneseq
    %v1246 = vshrl.u32 %v1245, 7
    %v1247 = vadd.s32 %v1246, 8
    %v1248 = vadd.s32 %v1246, 16
    %v1249 = vadd.s32 %v1246, 24
    %v1250 = vadd.s32 %v1246, 32
    %v1251 = vadd.s32 %v1246, 40
    %v1252 = vadd.s32 %v1246, 48
    %v1253 = vadd.s32 %v1246, 56
    %v1254 = vadd.s32 %v1246, 64
    %v1255 = vadd.s32 %v1246, 72
    %v1256 = vadd.s32 %v1246, 80
    %v1257 = vadd.s32 %v1246, 88
    %v1258 = vadd.s32 %v1246, 96
    %v1259 = vadd.s32 %v1246, 104
    %v1260 = vadd.s32 %v1246, 112
    %v1261 = vadd.s32 %v1246, 120
    %v1262 = vlaneseq
    %v1263 = vand.u32 %v1262, 127
    %vm1264 = vcmp.eq.s32.totalorder %v1246, %v1263
    %vm1265 = vcmp.eq.s32.totalorder %v1247, %v1263
    %vm1266 = vcmp.eq.s32.totalorder %v1248, %v1263
    %vm1267 = vcmp.eq.s32.totalorder %v1249, %v1263
    %vm1268 = vcmp.eq.s32.totalorder %v1250, %v1263
    %vm1269 = vcmp.eq.s32.totalorder %v1251, %v1263
    %vm1270 = vcmp.eq.s32.totalorder %v1252, %v1263
    %vm1271 = vcmp.eq.s32.totalorder %v1253, %v1263
    %vm1272 = vcmp.eq.s32.totalorder %v1254, %v1263
    %vm1273 = vcmp.eq.s32.totalorder %v1255, %v1263
    %vm1274 = vcmp.eq.s32.totalorder %v1256, %v1263
    %vm1275 = vcmp.eq.s32.totalorder %v1257, %v1263
    %vm1276 = vcmp.eq.s32.totalorder %v1258, %v1263
    %vm1277 = vcmp.eq.s32.totalorder %v1259, %v1263
    %vm1278 = vcmp.eq.s32.totalorder %v1260, %v1263
    %vm1279 = vcmp.eq.s32.totalorder %v1261, %v1263
    %v1280 = vsel %vm1264, 1.0, 0.0
    %v1281 = vsel %vm1265, 1.0, 0.0
    %v1282 = vsel %vm1266, 1.0, 0.0
    %v1283 = vsel %vm1267, 1.0, 0.0
    %v1284 = vsel %vm1268, 1.0, 0.0
    %v1285 = vsel %vm1269, 1.0, 0.0
    %v1286 = vsel %vm1270, 1.0, 0.0
    %v1287 = vsel %vm1271, 1.0, 0.0
    %v1288 = vsel %vm1272, 1.0, 0.0
    %v1289 = vsel %vm1273, 1.0, 0.0
    %v1290 = vsel %vm1274, 1.0, 0.0
    %v1291 = vsel %vm1275, 1.0, 0.0
    %v1292 = vsel %vm1276, 1.0, 0.0
    %v1293 = vsel %vm1277, 1.0, 0.0
    %v1294 = vsel %vm1278, 1.0, 0.0
    %v1295 = vsel %vm1279, 1.0, 0.0
    %v1296 = vsub.f32 %v1229, %v1280
    %v1297 = vsub.f32 %v1230, %v1281
    %v1298 = vsub.f32 %v1231, %v1282
    %v1299 = vsub.f32 %v1232, %v1283
    %v1300 = vsub.f32 %v1233, %v1284
    %v1301 = vsub.f32 %v1234, %v1285
    %v1302 = vsub.f32 %v1235, %v1286
    %v1303 = vsub.f32 %v1236, %v1287
    %v1304 = vsub.f32 %v1237, %v1288
    %v1305 = vsub.f32 %v1238, %v1289
    %v1306 = vsub.f32 %v1239, %v1290
    %v1307 = vsub.f32 %v1240, %v1291
    %v1308 = vsub.f32 %v1241, %v1292
    %v1309 = vsub.f32 %v1242, %v1293
    %v1310 = vsub.f32 %v1243, %v1294
    %v1311 = vsub.f32 %v1244, %v1295
    %s1312 = sld [smem:[#allocation2]]
    %v1313 = vstv %s1312
    %v1314 = vmul.f32 %v1296, %v1313
    %v1315 = vmul.f32 %v1297, %v1313
    %v1316 = vmul.f32 %v1298, %v1313
    %v1317 = vmul.f32 %v1299, %v1313
    %v1318 = vmul.f32 %v1300, %v1313
    %v1319 = vmul.f32 %v1301, %v1313
    %v1320 = vmul.f32 %v1302, %v1313
    %v1321 = vmul.f32 %v1303, %v1313
    %v1322 = vmul.f32 %v1304, %v1313
    %v1323 = vmul.f32 %v1305, %v1313
    %v1324 = vmul.f32 %v1306, %v1313
    %v1325 = vmul.f32 %v1307, %v1313
    %v1326 = vmul.f32 %v1308, %v1313
    %v1327 = vmul.f32 %v1309, %v1313
    %v1328 = vmul.f32 %v1310, %v1313
    %v1329 = vmul.f32 %v1311, %v1313
    %v1330 = vmul.f32 %v1314, 0.25
    %v1331 = vmul.f32 %v1315, 0.25
    %v1332 = vmul.f32 %v1316, 0.25
    %v1333 = vmul.f32 %v1317, 0.25
    %v1334 = vmul.f32 %v1318, 0.25
    %v1335 = vmul.f32 %v1319, 0.25
    %v1336 = vmul.f32 %v1320, 0.25
    %v1337 = vmul.f32 %v1321, 0.25
    %v1338 = vmul.f32 %v1322, 0.25
    %v1339 = vmul.f32 %v1323, 0.25
    %v1340 = vmul.f32 %v1324, 0.25
    %v1341 = vmul.f32 %v1325, 0.25
    %v1342 = vmul.f32 %v1326, 0.25
    %v1343 = vmul.f32 %v1327, 0.25
    %v1344 = vmul.f32 %v1328, 0.25
    %v1345 = vmul.f32 %v1329, 0.25
    %v1346 = vadd.f32 %v1280, %v1330
    %v1347 = vadd.f32 %v1281, %v1331
    %v1348 = vadd.f32 %v1282, %v1332
    %v1349 = vadd.f32 %v1283, %v1333
    %v1350 = vadd.f32 %v1284, %v1334
    %v1351 = vadd.f32 %v1285, %v1335
    %v1352 = vadd.f32 %v1286, %v1336
    %v1353 = vadd.f32 %v1287, %v1337
    %v1354 = vadd.f32 %v1288, %v1338
    %v1355 = vadd.f32 %v1289, %v1339
    %v1356 = vadd.f32 %v1290, %v1340
    %v1357 = vadd.f32 %v1291, %v1341
    %v1358 = vadd.f32 %v1292, %v1342
    %v1359 = vadd.f32 %v1293, %v1343
    %v1360 = vadd.f32 %v1294, %v1344
    %v1361 = vadd.f32 %v1295, %v1345
    %1362 = vmatpush.msra.mxu0 %v1361
    %1363 = vmatpush.msra.mxu0 %v1360
    %1364 = vmatpush.msra.mxu0 %v1359
    %1365 = vmatpush.msra.mxu0 %v1358
    %1366 = vmatpush.msra.mxu0 %v1357
    %1367 = vmatpush.msra.mxu0 %v1356
    %1368 = vmatpush.msra.mxu0 %v1355
    %1369 = vmatpush.msra.mxu0 %v1354
    %1370 = vmatpush.msra.mxu0 %v1353
    %1371 = vmatpush.msra.mxu0 %v1352
    %1372 = vmatpush.msra.mxu0 %v1351
    %1373 = vmatpush.msra.mxu0 %v1350
    %1374 = vmatpush.msra.mxu0 %v1349
    %1375 = vmatpush.msra.mxu0 %v1348
    %1376 = vmatpush.msra.mxu0 %v1347
    %1377 = vmatpush.msra.mxu0 %v1346
    %1378 = vmatmul.f32.gmra.mxu0 %v1314
    %v1379 = vpop.f32.mrf.mxu0
    %v1380 = vadd.f32 0.0, %v1379
    %1381 = vmatmul.f32.gmra.mxu0 %v1315
    %v1382 = vpop.f32.mrf.mxu0
    %v1383 = vadd.f32 0.0, %v1382
    %1384 = vmatmul.f32.gmra.mxu0 %v1316
    %v1385 = vpop.f32.mrf.mxu0
    %v1386 = vadd.f32 0.0, %v1385
    %1387 = vmatmul.f32.gmra.mxu0 %v1317
    %v1388 = vpop.f32.mrf.mxu0
    %v1389 = vadd.f32 0.0, %v1388
    %1390 = vmatmul.f32.gmra.mxu0 %v1318
    %v1391 = vpop.f32.mrf.mxu0
    %v1392 = vadd.f32 0.0, %v1391
    %1393 = vmatmul.f32.gmra.mxu0 %v1319
    %v1394 = vpop.f32.mrf.mxu0
    %v1395 = vadd.f32 0.0, %v1394
    %1396 = vmatmul.f32.gmra.mxu0 %v1320
    %v1397 = vpop.f32.mrf.mxu0
    %v1398 = vadd.f32 0.0, %v1397
    %1399 = vmatmul.f32.gmra.mxu0 %v1321
    %v1400 = vpop.f32.mrf.mxu0
    %v1401 = vadd.f32 0.0, %v1400
    %1402 = vmatmul.f32.gmra.mxu0 %v1322
    %v1403 = vpop.f32.mrf.mxu0
    %v1404 = vadd.f32 0.0, %v1403
    %1405 = vmatmul.f32.gmra.mxu0 %v1323
    %v1406 = vpop.f32.mrf.mxu0
    %v1407 = vadd.f32 0.0, %v1406
    %1408 = vmatmul.f32.gmra.mxu0 %v1324
    %v1409 = vpop.f32.mrf.mxu0
    %v1410 = vadd.f32 0.0, %v1409
    %1411 = vmatmul.f32.gmra.mxu0 %v1325
    %v1412 = vpop.f32.mrf.mxu0
    %v1413 = vadd.f32 0.0, %v1412
    %1414 = vmatmul.f32.gmra.mxu0 %v1326
    %v1415 = vpop.f32.mrf.mxu0
    %v1416 = vadd.f32 0.0, %v1415
    %1417 = vmatmul.f32.gmra.mxu0 %v1327
    %v1418 = vpop.f32.mrf.mxu0
    %v1419 = vadd.f32 0.0, %v1418
    %1420 = vmatmul.f32.gmra.mxu0 %v1328
    %v1421 = vpop.f32.mrf.mxu0
    %v1422 = vadd.f32 0.0, %v1421
    %1423 = vmatmul.f32.gmra.mxu0 %v1329
    %v1424 = vpop.f32.mrf.mxu0
    %v1425 = vadd.f32 0.0, %v1424
    %1426 = vdwg.mxu0
    %v1427 = vmul.f32 %v1380, 0.33333334
    %v1428 = vmul.f32 %v1383, 0.33333334
    %v1429 = vmul.f32 %v1386, 0.33333334
    %v1430 = vmul.f32 %v1389, 0.33333334
    %v1431 = vmul.f32 %v1392, 0.33333334
    %v1432 = vmul.f32 %v1395, 0.33333334
    %v1433 = vmul.f32 %v1398, 0.33333334
    %v1434 = vmul.f32 %v1401, 0.33333334
    %v1435 = vmul.f32 %v1404, 0.33333334
    %v1436 = vmul.f32 %v1407, 0.33333334
    %v1437 = vmul.f32 %v1410, 0.33333334
    %v1438 = vmul.f32 %v1413, 0.33333334
    %v1439 = vmul.f32 %v1416, 0.33333334
    %v1440 = vmul.f32 %v1419, 0.33333334
    %v1441 = vmul.f32 %v1422, 0.33333334
    %v1442 = vmul.f32 %v1425, 0.33333334
    %v1443 = vadd.f32 %v1280, %v1427
    %v1444 = vadd.f32 %v1281, %v1428
    %v1445 = vadd.f32 %v1282, %v1429
    %v1446 = vadd.f32 %v1283, %v1430
    %v1447 = vadd.f32 %v1284, %v1431
    %v1448 = vadd.f32 %v1285, %v1432
    %v1449 = vadd.f32 %v1286, %v1433
    %v1450 = vadd.f32 %v1287, %v1434
    %v1451 = vadd.f32 %v1288, %v1435
    %v1452 = vadd.f32 %v1289, %v1436
    %v1453 = vadd.f32 %v1290, %v1437
    %v1454 = vadd.f32 %v1291, %v1438
    %v1455 = vadd.f32 %v1292, %v1439
    %v1456 = vadd.f32 %v1293, %v1440
    %v1457 = vadd.f32 %v1294, %v1441
    %v1458 = vadd.f32 %v1295, %v1442
    %1459 = vmatpush.msra.mxu0 %v1458
    %1460 = vmatpush.msra.mxu0 %v1457
    %1461 = vmatpush.msra.mxu0 %v1456
    %1462 = vmatpush.msra.mxu0 %v1455
    %1463 = vmatpush.msra.mxu0 %v1454
    %1464 = vmatpush.msra.mxu0 %v1453
    %1465 = vmatpush.msra.mxu0 %v1452
    %1466 = vmatpush.msra.mxu0 %v1451
    %1467 = vmatpush.msra.mxu0 %v1450
    %1468 = vmatpush.msra.mxu0 %v1449
    %1469 = vmatpush.msra.mxu0 %v1448
    %1470 = vmatpush.msra.mxu0 %v1447
    %1471 = vmatpush.msra.mxu0 %v1446
    %1472 = vmatpush.msra.mxu0 %v1445
    %1473 = vmatpush.msra.mxu0 %v1444
    %1474 = vmatpush.msra.mxu0 %v1443
    %1475 = vmatmul.f32.gmra.mxu0 %v1314
    %v1476 = vpop.f32.mrf.mxu0
    %v1477 = vadd.f32 0.0, %v1476
    %1478 = vmatmul.f32.gmra.mxu0 %v1315
    %v1479 = vpop.f32.mrf.mxu0
    %v1480 = vadd.f32 0.0, %v1479
    %1481 = vmatmul.f32.gmra.mxu0 %v1316
    %v1482 = vpop.f32.mrf.mxu0
    %v1483 = vadd.f32 0.0, %v1482
    %1484 = vmatmul.f32.gmra.mxu0 %v1317
    %v1485 = vpop.f32.mrf.mxu0
    %v1486 = vadd.f32 0.0, %v1485
    %1487 = vmatmul.f32.gmra.mxu0 %v1318
    %v1488 = vpop.f32.mrf.mxu0
    %v1489 = vadd.f32 0.0, %v1488
    %1490 = vmatmul.f32.gmra.mxu0 %v1319
    %v1491 = vpop.f32.mrf.mxu0
    %v1492 = vadd.f32 0.0, %v1491
    %1493 = vmatmul.f32.gmra.mxu0 %v1320
    %v1494 = vpop.f32.mrf.mxu0
    %v1495 = vadd.f32 0.0, %v1494
    %1496 = vmatmul.f32.gmra.mxu0 %v1321
    %v1497 = vpop.f32.mrf.mxu0
    %v1498 = vadd.f32 0.0, %v1497
    %1499 = vmatmul.f32.gmra.mxu0 %v1322
    %v1500 = vpop.f32.mrf.mxu0
    %v1501 = vadd.f32 0.0, %v1500
    %1502 = vmatmul.f32.gmra.mxu0 %v1323
    %v1503 = vpop.f32.mrf.mxu0
    %v1504 = vadd.f32 0.0, %v1503
    %1505 = vmatmul.f32.gmra.mxu0 %v1324
    %v1506 = vpop.f32.mrf.mxu0
    %v1507 = vadd.f32 0.0, %v1506
    %1508 = vmatmul.f32.gmra.mxu0 %v1325
    %v1509 = vpop.f32.mrf.mxu0
    %v1510 = vadd.f32 0.0, %v1509
    %1511 = vmatmul.f32.gmra.mxu0 %v1326
    %v1512 = vpop.f32.mrf.mxu0
    %v1513 = vadd.f32 0.0, %v1512
    %1514 = vmatmul.f32.gmra.mxu0 %v1327
    %v1515 = vpop.f32.mrf.mxu0
    %v1516 = vadd.f32 0.0, %v1515
    %1517 = vmatmul.f32.gmra.mxu0 %v1328
    %v1518 = vpop.f32.mrf.mxu0
    %v1519 = vadd.f32 0.0, %v1518
    %1520 = vmatmul.f32.gmra.mxu0 %v1329
    %v1521 = vpop.f32.mrf.mxu0
    %v1522 = vadd.f32 0.0, %v1521
    %1523 = vdwg.mxu0
    %v1524 = vmul.f32 %v1477, 0.5
    %v1525 = vmul.f32 %v1480, 0.5
    %v1526 = vmul.f32 %v1483, 0.5
    %v1527 = vmul.f32 %v1486, 0.5
    %v1528 = vmul.f32 %v1489, 0.5
    %v1529 = vmul.f32 %v1492, 0.5
    %v1530 = vmul.f32 %v1495, 0.5
    %v1531 = vmul.f32 %v1498, 0.5
    %v1532 = vmul.f32 %v1501, 0.5
    %v1533 = vmul.f32 %v1504, 0.5
    %v1534 = vmul.f32 %v1507, 0.5
    %v1535 = vmul.f32 %v1510, 0.5
    %v1536 = vmul.f32 %v1513, 0.5
    %v1537 = vmul.f32 %v1516, 0.5
    %v1538 = vmul.f32 %v1519, 0.5
    %v1539 = vmul.f32 %v1522, 0.5
    %v1540 = vadd.f32 %v1280, %v1524
    %v1541 = vadd.f32 %v1281, %v1525
    %v1542 = vadd.f32 %v1282, %v1526
    %v1543 = vadd.f32 %v1283, %v1527
    %v1544 = vadd.f32 %v1284, %v1528
    %v1545 = vadd.f32 %v1285, %v1529
    %v1546 = vadd.f32 %v1286, %v1530
    %v1547 = vadd.f32 %v1287, %v1531
    %v1548 = vadd.f32 %v1288, %v1532
    %v1549 = vadd.f32 %v1289, %v1533
    %v1550 = vadd.f32 %v1290, %v1534
    %v1551 = vadd.f32 %v1291, %v1535
    %v1552 = vadd.f32 %v1292, %v1536
    %v1553 = vadd.f32 %v1293, %v1537
    %v1554 = vadd.f32 %v1294, %v1538
    %v1555 = vadd.f32 %v1295, %v1539
    %1556 = vmatpush.msra.mxu0 %v1555
    %1557 = vmatpush.msra.mxu0 %v1554
    %1558 = vmatpush.msra.mxu0 %v1553
    %1559 = vmatpush.msra.mxu0 %v1552
    %1560 = vmatpush.msra.mxu0 %v1551
    %1561 = vmatpush.msra.mxu0 %v1550
    %1562 = vmatpush.msra.mxu0 %v1549
    %1563 = vmatpush.msra.mxu0 %v1548
    %1564 = vmatpush.msra.mxu0 %v1547
    %1565 = vmatpush.msra.mxu0 %v1546
    %1566 = vmatpush.msra.mxu0 %v1545
    %1567 = vmatpush.msra.mxu0 %v1544
    %1568 = vmatpush.msra.mxu0 %v1543
    %1569 = vmatpush.msra.mxu0 %v1542
    %1570 = vmatpush.msra.mxu0 %v1541
    %1571 = vmatpush.msra.mxu0 %v1540
    %1572 = vmatmul.f32.gmra.mxu0 %v1314
    %v1573 = vpop.f32.mrf.mxu0
    %v1574 = vadd.f32 0.0, %v1573
    %1575 = vmatmul.f32.gmra.mxu0 %v1315
    %v1576 = vpop.f32.mrf.mxu0
    %v1577 = vadd.f32 0.0, %v1576
    %1578 = vmatmul.f32.gmra.mxu0 %v1316
    %v1579 = vpop.f32.mrf.mxu0
    %v1580 = vadd.f32 0.0, %v1579
    %1581 = vmatmul.f32.gmra.mxu0 %v1317
    %v1582 = vpop.f32.mrf.mxu0
    %v1583 = vadd.f32 0.0, %v1582
    %1584 = vmatmul.f32.gmra.mxu0 %v1318
    %v1585 = vpop.f32.mrf.mxu0
    %v1586 = vadd.f32 0.0, %v1585
    %1587 = vmatmul.f32.gmra.mxu0 %v1319
    %v1588 = vpop.f32.mrf.mxu0
    %v1589 = vadd.f32 0.0, %v1588
    %1590 = vmatmul.f32.gmra.mxu0 %v1320
    %v1591 = vpop.f32.mrf.mxu0
    %v1592 = vadd.f32 0.0, %v1591
    %1593 = vmatmul.f32.gmra.mxu0 %v1321
    %v1594 = vpop.f32.mrf.mxu0
    %v1595 = vadd.f32 0.0, %v1594
    %1596 = vmatmul.f32.gmra.mxu0 %v1322
    %v1597 = vpop.f32.mrf.mxu0
    %v1598 = vadd.f32 0.0, %v1597
    %1599 = vmatmul.f32.gmra.mxu0 %v1323
    %v1600 = vpop.f32.mrf.mxu0
    %v1601 = vadd.f32 0.0, %v1600
    %1602 = vmatmul.f32.gmra.mxu0 %v1324
    %v1603 = vpop.f32.mrf.mxu0
    %v1604 = vadd.f32 0.0, %v1603
    %1605 = vmatmul.f32.gmra.mxu0 %v1325
    %v1606 = vpop.f32.mrf.mxu0
    %v1607 = vadd.f32 0.0, %v1606
    %1608 = vmatmul.f32.gmra.mxu0 %v1326
    %v1609 = vpop.f32.mrf.mxu0
    %v1610 = vadd.f32 0.0, %v1609
    %1611 = vmatmul.f32.gmra.mxu0 %v1327
    %v1612 = vpop.f32.mrf.mxu0
    %v1613 = vadd.f32 0.0, %v1612
    %1614 = vmatmul.f32.gmra.mxu0 %v1328
    %v1615 = vpop.f32.mrf.mxu0
    %v1616 = vadd.f32 0.0, %v1615
    %1617 = vmatmul.f32.gmra.mxu0 %v1329
    %v1618 = vpop.f32.mrf.mxu0
    %v1619 = vadd.f32 0.0, %v1618
    %1620 = vdwg.mxu0
    %v1621 = vadd.f32 %v1280, %v1574
    %v1622 = vadd.f32 %v1281, %v1577
    %v1623 = vadd.f32 %v1282, %v1580
    %v1624 = vadd.f32 %v1283, %v1583
    %v1625 = vadd.f32 %v1284, %v1586
    %v1626 = vadd.f32 %v1285, %v1589
    %v1627 = vadd.f32 %v1286, %v1592
    %v1628 = vadd.f32 %v1287, %v1595
    %v1629 = vadd.f32 %v1288, %v1598
    %v1630 = vadd.f32 %v1289, %v1601
    %v1631 = vadd.f32 %v1290, %v1604
    %v1632 = vadd.f32 %v1291, %v1607
    %v1633 = vadd.f32 %v1292, %v1610
    %v1634 = vadd.f32 %v1293, %v1613
    %v1635 = vadd.f32 %v1294, %v1616
    %v1636 = vadd.f32 %v1295, %v1619
    %1637 = vmatpush.msra.mxu0 %v1636
    %1638 = vmatpush.msra.mxu0 %v1635
    %1639 = vmatpush.msra.mxu0 %v1634
    %1640 = vmatpush.msra.mxu0 %v1633
    %1641 = vmatpush.msra.mxu0 %v1632
    %1642 = vmatpush.msra.mxu0 %v1631
    %1643 = vmatpush.msra.mxu0 %v1630
    %1644 = vmatpush.msra.mxu0 %v1629
    %1645 = vmatpush.msra.mxu0 %v1628
    %1646 = vmatpush.msra.mxu0 %v1627
    %1647 = vmatpush.msra.mxu0 %v1626
    %1648 = vmatpush.msra.mxu0 %v1625
    %1649 = vmatpush.msra.mxu0 %v1624
    %1650 = vmatpush.msra.mxu0 %v1623
    %1651 = vmatpush.msra.mxu0 %v1622
    %1652 = vmatpush.msra.mxu0 %v1621
    %1653 = vmatmul.f32.gmra.mxu0 %v1621
    %v1654 = vpop.f32.mrf.mxu0
    %v1655 = vadd.f32 0.0, %v1654
    %1656 = vmatmul.f32.gmra.mxu0 %v1622
    %v1657 = vpop.f32.mrf.mxu0
    %v1658 = vadd.f32 0.0, %v1657
    %1659 = vmatmul.f32.gmra.mxu0 %v1623
    %v1660 = vpop.f32.mrf.mxu0
    %v1661 = vadd.f32 0.0, %v1660
    %1662 = vmatmul.f32.gmra.mxu0 %v1624
    %v1663 = vpop.f32.mrf.mxu0
    %v1664 = vadd.f32 0.0, %v1663
    %1665 = vmatmul.f32.gmra.mxu0 %v1625
    %v1666 = vpop.f32.mrf.mxu0
    %v1667 = vadd.f32 0.0, %v1666
    %1668 = vmatmul.f32.gmra.mxu0 %v1626
    %v1669 = vpop.f32.mrf.mxu0
    %v1670 = vadd.f32 0.0, %v1669
    %1671 = vmatmul.f32.gmra.mxu0 %v1627
    %v1672 = vpop.f32.mrf.mxu0
    %v1673 = vadd.f32 0.0, %v1672
    %1674 = vmatmul.f32.gmra.mxu0 %v1628
    %v1675 = vpop.f32.mrf.mxu0
    %v1676 = vadd.f32 0.0, %v1675
    %1677 = vmatmul.f32.gmra.mxu0 %v1629
    %v1678 = vpop.f32.mrf.mxu0
    %v1679 = vadd.f32 0.0, %v1678
    %1680 = vmatmul.f32.gmra.mxu0 %v1630
    %v1681 = vpop.f32.mrf.mxu0
    %v1682 = vadd.f32 0.0, %v1681
    %1683 = vmatmul.f32.gmra.mxu0 %v1631
    %v1684 = vpop.f32.mrf.mxu0
    %v1685 = vadd.f32 0.0, %v1684
    %1686 = vmatmul.f32.gmra.mxu0 %v1632
    %v1687 = vpop.f32.mrf.mxu0
    %v1688 = vadd.f32 0.0, %v1687
    %1689 = vmatmul.f32.gmra.mxu0 %v1633
    %v1690 = vpop.f32.mrf.mxu0
    %v1691 = vadd.f32 0.0, %v1690
    %1692 = vmatmul.f32.gmra.mxu0 %v1634
    %v1693 = vpop.f32.mrf.mxu0
    %v1694 = vadd.f32 0.0, %v1693
    %1695 = vmatmul.f32.gmra.mxu0 %v1635
    %v1696 = vpop.f32.mrf.mxu0
    %v1697 = vadd.f32 0.0, %v1696
    %1698 = vmatmul.f32.gmra.mxu0 %v1636
    %v1699 = vpop.f32.mrf.mxu0
    %v1700 = vadd.f32 0.0, %v1699
    %1701 = vdwg.mxu0
    %1702 = vmatpush.msra.mxu0 %v1700
    %1703 = vmatpush.msra.mxu0 %v1697
    %1704 = vmatpush.msra.mxu0 %v1694
    %1705 = vmatpush.msra.mxu0 %v1691
    %1706 = vmatpush.msra.mxu0 %v1688
    %1707 = vmatpush.msra.mxu0 %v1685
    %1708 = vmatpush.msra.mxu0 %v1682
    %1709 = vmatpush.msra.mxu0 %v1679
    %1710 = vmatpush.msra.mxu0 %v1676
    %1711 = vmatpush.msra.mxu0 %v1673
    %1712 = vmatpush.msra.mxu0 %v1670
    %1713 = vmatpush.msra.mxu0 %v1667
    %1714 = vmatpush.msra.mxu0 %v1664
    %1715 = vmatpush.msra.mxu0 %v1661
    %1716 = vmatpush.msra.mxu0 %v1658
    %1717 = vmatpush.msra.mxu0 %v1655
    %1718 = vmatmul.f32.gmra.mxu0 %v1655
    %v1719 = vpop.f32.mrf.mxu0
    %v1720 = vadd.f32 0.0, %v1719
    %1721 = vmatmul.f32.gmra.mxu0 %v1658
    %v1722 = vpop.f32.mrf.mxu0
    %v1723 = vadd.f32 0.0, %v1722
    %1724 = vmatmul.f32.gmra.mxu0 %v1661
    %v1725 = vpop.f32.mrf.mxu0
    %v1726 = vadd.f32 0.0, %v1725
    %1727 = vmatmul.f32.gmra.mxu0 %v1664
    %v1728 = vpop.f32.mrf.mxu0
    %v1729 = vadd.f32 0.0, %v1728
    %1730 = vmatmul.f32.gmra.mxu0 %v1667
    %v1731 = vpop.f32.mrf.mxu0
    %v1732 = vadd.f32 0.0, %v1731
    %1733 = vmatmul.f32.gmra.mxu0 %v1670
    %v1734 = vpop.f32.mrf.mxu0
    %v1735 = vadd.f32 0.0, %v1734
    %1736 = vmatmul.f32.gmra.mxu0 %v1673
    %v1737 = vpop.f32.mrf.mxu0
    %v1738 = vadd.f32 0.0, %v1737
    %1739 = vmatmul.f32.gmra.mxu0 %v1676
    %v1740 = vpop.f32.mrf.mxu0
    %v1741 = vadd.f32 0.0, %v1740
    %1742 = vmatmul.f32.gmra.mxu0 %v1679
    %v1743 = vpop.f32.mrf.mxu0
    %v1744 = vadd.f32 0.0, %v1743
    %1745 = vmatmul.f32.gmra.mxu0 %v1682
    %v1746 = vpop.f32.mrf.mxu0
    %v1747 = vadd.f32 0.0, %v1746
    %1748 = vmatmul.f32.gmra.mxu0 %v1685
    %v1749 = vpop.f32.mrf.mxu0
    %v1750 = vadd.f32 0.0, %v1749
    %1751 = vmatmul.f32.gmra.mxu0 %v1688
    %v1752 = vpop.f32.mrf.mxu0
    %v1753 = vadd.f32 0.0, %v1752
    %1754 = vmatmul.f32.gmra.mxu0 %v1691
    %v1755 = vpop.f32.mrf.mxu0
    %v1756 = vadd.f32 0.0, %v1755
    %1757 = vmatmul.f32.gmra.mxu0 %v1694
    %v1758 = vpop.f32.mrf.mxu0
    %v1759 = vadd.f32 0.0, %v1758
    %1760 = vmatmul.f32.gmra.mxu0 %v1697
    %v1761 = vpop.f32.mrf.mxu0
    %v1762 = vadd.f32 0.0, %v1761
    %1763 = vmatmul.f32.gmra.mxu0 %v1700
    %v1764 = vpop.f32.mrf.mxu0
    %v1765 = vadd.f32 0.0, %v1764
    %1766 = vdwg.mxu0
    %1767 = vmatpush.msra.mxu0 %v1765
    %1768 = vmatpush.msra.mxu0 %v1762
    %1769 = vmatpush.msra.mxu0 %v1759
    %1770 = vmatpush.msra.mxu0 %v1756
    %1771 = vmatpush.msra.mxu0 %v1753
    %1772 = vmatpush.msra.mxu0 %v1750
    %1773 = vmatpush.msra.mxu0 %v1747
    %1774 = vmatpush.msra.mxu0 %v1744
    %1775 = vmatpush.msra.mxu0 %v1741
    %1776 = vmatpush.msra.mxu0 %v1738
    %1777 = vmatpush.msra.mxu0 %v1735
    %1778 = vmatpush.msra.mxu0 %v1732
    %1779 = vmatpush.msra.mxu0 %v1729
    %1780 = vmatpush.msra.mxu0 %v1726
    %1781 = vmatpush.msra.mxu0 %v1723
    %1782 = vmatpush.msra.mxu0 %v1720
    %1783 = vmatmul.f32.gmra.mxu0 %v1720
    %v1784 = vpop.f32.mrf.mxu0
    %v1785 = vadd.f32 0.0, %v1784
    %1786 = vmatmul.f32.gmra.mxu0 %v1723
    %v1787 = vpop.f32.mrf.mxu0
    %v1788 = vadd.f32 0.0, %v1787
    %1789 = vmatmul.f32.gmra.mxu0 %v1726
    %v1790 = vpop.f32.mrf.mxu0
    %v1791 = vadd.f32 0.0, %v1790
    %1792 = vmatmul.f32.gmra.mxu0 %v1729
    %v1793 = vpop.f32.mrf.mxu0
    %v1794 = vadd.f32 0.0, %v1793
    %1795 = vmatmul.f32.gmra.mxu0 %v1732
    %v1796 = vpop.f32.mrf.mxu0
    %v1797 = vadd.f32 0.0, %v1796
    %1798 = vmatmul.f32.gmra.mxu0 %v1735
    %v1799 = vpop.f32.mrf.mxu0
    %v1800 = vadd.f32 0.0, %v1799
    %1801 = vmatmul.f32.gmra.mxu0 %v1738
    %v1802 = vpop.f32.mrf.mxu0
    %v1803 = vadd.f32 0.0, %v1802
    %1804 = vmatmul.f32.gmra.mxu0 %v1741
    %v1805 = vpop.f32.mrf.mxu0
    %v1806 = vadd.f32 0.0, %v1805
    %1807 = vmatmul.f32.gmra.mxu0 %v1744
    %v1808 = vpop.f32.mrf.mxu0
    %v1809 = vadd.f32 0.0, %v1808
    %1810 = vmatmul.f32.gmra.mxu0 %v1747
    %v1811 = vpop.f32.mrf.mxu0
    %v1812 = vadd.f32 0.0, %v1811
    %1813 = vmatmul.f32.gmra.mxu0 %v1750
    %v1814 = vpop.f32.mrf.mxu0
    %v1815 = vadd.f32 0.0, %v1814
    %1816 = vmatmul.f32.gmra.mxu0 %v1753
    %v1817 = vpop.f32.mrf.mxu0
    %v1818 = vadd.f32 0.0, %v1817
    %1819 = vmatmul.f32.gmra.mxu0 %v1756
    %v1820 = vpop.f32.mrf.mxu0
    %v1821 = vadd.f32 0.0, %v1820
    %1822 = vmatmul.f32.gmra.mxu0 %v1759
    %v1823 = vpop.f32.mrf.mxu0
    %v1824 = vadd.f32 0.0, %v1823
    %1825 = vmatmul.f32.gmra.mxu0 %v1762
    %v1826 = vpop.f32.mrf.mxu0
    %v1827 = vadd.f32 0.0, %v1826
    %1828 = vmatmul.f32.gmra.mxu0 %v1765
    %v1829 = vpop.f32.mrf.mxu0
    %v1830 = vadd.f32 0.0, %v1829
    %1831 = vdwg.mxu0
    %1832 = vst [vmem:[#allocation3] sm:$0xff] %v702
    %1833 = vst [vmem:[#allocation3 + $0x8] sm:$0xff] %v703
    %1834 = vst [vmem:[#allocation3 + $0x10] sm:$0xff] %v704
    %1835 = vst [vmem:[#allocation3 + $0x18] sm:$0xff] %v705
    %1836 = vmatpush.msra.mxu0 %v1830
    %1837 = vmatpush.msra.mxu0 %v1827
    %1838 = vmatpush.msra.mxu0 %v1824
    %1839 = vmatpush.msra.mxu0 %v1821
    %1840 = vmatpush.msra.mxu0 %v1818
    %1841 = vmatpush.msra.mxu0 %v1815
    %1842 = vmatpush.msra.mxu0 %v1812
    %1843 = vmatpush.msra.mxu0 %v1809
    %1844 = vmatpush.msra.mxu0 %v1806
    %1845 = vmatpush.msra.mxu0 %v1803
    %1846 = vmatpush.msra.mxu0 %v1800
    %1847 = vmatpush.msra.mxu0 %v1797
    %1848 = vmatpush.msra.mxu0 %v1794
    %1849 = vmatpush.msra.mxu0 %v1791
    %1850 = vmatpush.msra.mxu0 %v1788
    %1851 = vmatpush.msra.mxu0 %v1785
    %1852 = vmatmul.f32.gmra.mxu0 %v702
    %v1853 = vpop.f32.mrf.mxu0
    %v1854 = vadd.f32 0.0, %v1853
    %1855 = vmatmul.f32.gmra.mxu0 %v703
    %v1856 = vpop.f32.mrf.mxu0
    %v1857 = vadd.f32 0.0, %v1856
    %1858 = vmatmul.f32.gmra.mxu0 %v704
    %v1859 = vpop.f32.mrf.mxu0
    %v1860 = vadd.f32 0.0, %v1859
    %1861 = vmatmul.f32.gmra.mxu0 %v705
    %v1862 = vpop.f32.mrf.mxu0
    %v1863 = vadd.f32 0.0, %v1862
    %1864 = vdwg.mxu0
    %s1865 = scalar_lea.vmem [#allocation3], 32
    %1866 = vst [vmem:[%s1865] sm:$0xff] %v1854
    %1867 = vst [vmem:[%s1865 + $0x8] sm:$0xff] %v1857
    %1868 = vst [vmem:[%s1865 + $0x10] sm:$0xff] %v1860
    %1869 = vst [vmem:[%s1865 + $0x18] sm:$0xff] %v1863
    %1870 = vmatpush.msra.mxu0 %v1830
    %1871 = vmatpush.msra.mxu0 %v1827
    %1872 = vmatpush.msra.mxu0 %v1824
    %1873 = vmatpush.msra.mxu0 %v1821
    %1874 = vmatpush.msra.mxu0 %v1818
    %1875 = vmatpush.msra.mxu0 %v1815
    %1876 = vmatpush.msra.mxu0 %v1812
    %1877 = vmatpush.msra.mxu0 %v1809
    %1878 = vmatpush.msra.mxu0 %v1806
    %1879 = vmatpush.msra.mxu0 %v1803
    %1880 = vmatpush.msra.mxu0 %v1800
    %1881 = vmatpush.msra.mxu0 %v1797
    %1882 = vmatpush.msra.mxu0 %v1794
    %1883 = vmatpush.msra.mxu0 %v1791
    %1884 = vmatpush.msra.mxu0 %v1788
    %1885 = vmatpush.msra.mxu0 %v1785
    %1886 = vmatmul.f32.gmra.mxu0 %v1854
    %v1887 = vpop.f32.mrf.mxu0
    %v1888 = vadd.f32 0.0, %v1887
    %1889 = vmatmul.f32.gmra.mxu0 %v1857
    %v1890 = vpop.f32.mrf.mxu0
    %v1891 = vadd.f32 0.0, %v1890
    %1892 = vmatmul.f32.gmra.mxu0 %v1860
    %v1893 = vpop.f32.mrf.mxu0
    %v1894 = vadd.f32 0.0, %v1893
    %1895 = vmatmul.f32.gmra.mxu0 %v1863
    %v1896 = vpop.f32.mrf.mxu0
    %v1897 = vadd.f32 0.0, %v1896
    %1898 = vdwg.mxu0
    %s1899 = scalar_lea.vmem [#allocation3], 64
    %1900 = vst [vmem:[%s1899] sm:$0xff] %v1888
    %1901 = vst [vmem:[%s1899 + $0x8] sm:$0xff] %v1891
    %1902 = vst [vmem:[%s1899 + $0x10] sm:$0xff] %v1894
    %1903 = vst [vmem:[%s1899 + $0x18] sm:$0xff] %v1897
    %1904 = vmatpush.msra.mxu0 %v1830
    %1905 = vmatpush.msra.mxu0 %v1827
    %1906 = vmatpush.msra.mxu0 %v1824
    %1907 = vmatpush.msra.mxu0 %v1821
    %1908 = vmatpush.msra.mxu0 %v1818
    %1909 = vmatpush.msra.mxu0 %v1815
    %1910 = vmatpush.msra.mxu0 %v1812
    %1911 = vmatpush.msra.mxu0 %v1809
    %1912 = vmatpush.msra.mxu0 %v1806
    %1913 = vmatpush.msra.mxu0 %v1803
    %1914 = vmatpush.msra.mxu0 %v1800
    %1915 = vmatpush.msra.mxu0 %v1797
    %1916 = vmatpush.msra.mxu0 %v1794
    %1917 = vmatpush.msra.mxu0 %v1791
    %1918 = vmatpush.msra.mxu0 %v1788
    %1919 = vmatpush.msra.mxu0 %v1785
    %1920 = vmatmul.f32.gmra.mxu0 %v1888
    %v1921 = vpop.f32.mrf.mxu0
    %v1922 = vadd.f32 0.0, %v1921
    %1923 = vmatmul.f32.gmra.mxu0 %v1891
    %v1924 = vpop.f32.mrf.mxu0
    %v1925 = vadd.f32 0.0, %v1924
    %1926 = vmatmul.f32.gmra.mxu0 %v1894
    %v1927 = vpop.f32.mrf.mxu0
    %v1928 = vadd.f32 0.0, %v1927
    %1929 = vmatmul.f32.gmra.mxu0 %v1897
    %v1930 = vpop.f32.mrf.mxu0
    %v1931 = vadd.f32 0.0, %v1930
    %1932 = vdwg.mxu0
    %s1933 = scalar_lea.vmem [#allocation3], 96
    %1934 = vst [vmem:[%s1933] sm:$0xff] %v1922
    %1935 = vst [vmem:[%s1933 + $0x8] sm:$0xff] %v1925
    %1936 = vst [vmem:[%s1933 + $0x10] sm:$0xff] %v1928
    %1937 = vst [vmem:[%s1933 + $0x18] sm:$0xff] %v1931
    %1938 = vmatpush.msra.mxu0 %v1830
    %1939 = vmatpush.msra.mxu0 %v1827
    %1940 = vmatpush.msra.mxu0 %v1824
    %1941 = vmatpush.msra.mxu0 %v1821
    %1942 = vmatpush.msra.mxu0 %v1818
    %1943 = vmatpush.msra.mxu0 %v1815
    %1944 = vmatpush.msra.mxu0 %v1812
    %1945 = vmatpush.msra.mxu0 %v1809
    %1946 = vmatpush.msra.mxu0 %v1806
    %1947 = vmatpush.msra.mxu0 %v1803
    %1948 = vmatpush.msra.mxu0 %v1800
    %1949 = vmatpush.msra.mxu0 %v1797
    %1950 = vmatpush.msra.mxu0 %v1794
    %1951 = vmatpush.msra.mxu0 %v1791
    %1952 = vmatpush.msra.mxu0 %v1788
    %1953 = vmatpush.msra.mxu0 %v1785
    %1954 = vmatmul.f32.gmra.mxu0 %v1922
    %v1955 = vpop.f32.mrf.mxu0
    %v1956 = vadd.f32 0.0, %v1955
    %1957 = vmatmul.f32.gmra.mxu0 %v1925
    %v1958 = vpop.f32.mrf.mxu0
    %v1959 = vadd.f32 0.0, %v1958
    %1960 = vmatmul.f32.gmra.mxu0 %v1928
    %v1961 = vpop.f32.mrf.mxu0
    %v1962 = vadd.f32 0.0, %v1961
    %1963 = vmatmul.f32.gmra.mxu0 %v1931
    %v1964 = vpop.f32.mrf.mxu0
    %v1965 = vadd.f32 0.0, %v1964
    %1966 = vdwg.mxu0
    %s1967 = scalar_lea.vmem [#allocation3], 128
    %1968 = vst [vmem:[%s1967] sm:$0xff] %v1956
    %1969 = vst [vmem:[%s1967 + $0x8] sm:$0xff] %v1959
    %1970 = vst [vmem:[%s1967 + $0x10] sm:$0xff] %v1962
    %1971 = vst [vmem:[%s1967 + $0x18] sm:$0xff] %v1965
    %1972 = vmatpush.msra.mxu0 %v1830
    %1973 = vmatpush.msra.mxu0 %v1827
    %1974 = vmatpush.msra.mxu0 %v1824
    %1975 = vmatpush.msra.mxu0 %v1821
    %1976 = vmatpush.msra.mxu0 %v1818
    %1977 = vmatpush.msra.mxu0 %v1815
    %1978 = vmatpush.msra.mxu0 %v1812
    %1979 = vmatpush.msra.mxu0 %v1809
    %1980 = vmatpush.msra.mxu0 %v1806
    %1981 = vmatpush.msra.mxu0 %v1803
    %1982 = vmatpush.msra.mxu0 %v1800
    %1983 = vmatpush.msra.mxu0 %v1797
    %1984 = vmatpush.msra.mxu0 %v1794
    %1985 = vmatpush.msra.mxu0 %v1791
    %1986 = vmatpush.msra.mxu0 %v1788
    %1987 = vmatpush.msra.mxu0 %v1785
    %1988 = vmatmul.f32.gmra.mxu0 %v1956
    %v1989 = vpop.f32.mrf.mxu0
    %v1990 = vadd.f32 0.0, %v1989
    %1991 = vmatmul.f32.gmra.mxu0 %v1959
    %v1992 = vpop.f32.mrf.mxu0
    %v1993 = vadd.f32 0.0, %v1992
    %1994 = vmatmul.f32.gmra.mxu0 %v1962
    %v1995 = vpop.f32.mrf.mxu0
    %v1996 = vadd.f32 0.0, %v1995
    %1997 = vmatmul.f32.gmra.mxu0 %v1965
    %v1998 = vpop.f32.mrf.mxu0
    %v1999 = vadd.f32 0.0, %v1998
    %2000 = vdwg.mxu0
    %s2001 = scalar_lea.vmem [#allocation3], 160
    %2002 = vst [vmem:[%s2001] sm:$0xff] %v1990
    %2003 = vst [vmem:[%s2001 + $0x8] sm:$0xff] %v1993
    %2004 = vst [vmem:[%s2001 + $0x10] sm:$0xff] %v1996
    %2005 = vst [vmem:[%s2001 + $0x18] sm:$0xff] %v1999
    %2006 = vmatpush.msra.mxu0 %v1830
    %2007 = vmatpush.msra.mxu0 %v1827
    %2008 = vmatpush.msra.mxu0 %v1824
    %2009 = vmatpush.msra.mxu0 %v1821
    %2010 = vmatpush.msra.mxu0 %v1818
    %2011 = vmatpush.msra.mxu0 %v1815
    %2012 = vmatpush.msra.mxu0 %v1812
    %2013 = vmatpush.msra.mxu0 %v1809
    %2014 = vmatpush.msra.mxu0 %v1806
    %2015 = vmatpush.msra.mxu0 %v1803
    %2016 = vmatpush.msra.mxu0 %v1800
    %2017 = vmatpush.msra.mxu0 %v1797
    %2018 = vmatpush.msra.mxu0 %v1794
    %2019 = vmatpush.msra.mxu0 %v1791
    %2020 = vmatpush.msra.mxu0 %v1788
    %2021 = vmatpush.msra.mxu0 %v1785
    %2022 = vmatmul.f32.gmra.mxu0 %v1990
    %v2023 = vpop.f32.mrf.mxu0
    %v2024 = vadd.f32 0.0, %v2023
    %2025 = vmatmul.f32.gmra.mxu0 %v1993
    %v2026 = vpop.f32.mrf.mxu0
    %v2027 = vadd.f32 0.0, %v2026
    %2028 = vmatmul.f32.gmra.mxu0 %v1996
    %v2029 = vpop.f32.mrf.mxu0
    %v2030 = vadd.f32 0.0, %v2029
    %2031 = vmatmul.f32.gmra.mxu0 %v1999
    %v2032 = vpop.f32.mrf.mxu0
    %v2033 = vadd.f32 0.0, %v2032
    %2034 = vdwg.mxu0
    %s2035 = scalar_lea.vmem [#allocation3], 192
    %2036 = vst [vmem:[%s2035] sm:$0xff] %v2024
    %2037 = vst [vmem:[%s2035 + $0x8] sm:$0xff] %v2027
    %2038 = vst [vmem:[%s2035 + $0x10] sm:$0xff] %v2030
    %2039 = vst [vmem:[%s2035 + $0x18] sm:$0xff] %v2033
    %2040 = vmatpush.msra.mxu0 %v1830
    %2041 = vmatpush.msra.mxu0 %v1827
    %2042 = vmatpush.msra.mxu0 %v1824
    %2043 = vmatpush.msra.mxu0 %v1821
    %2044 = vmatpush.msra.mxu0 %v1818
    %2045 = vmatpush.msra.mxu0 %v1815
    %2046 = vmatpush.msra.mxu0 %v1812
    %2047 = vmatpush.msra.mxu0 %v1809
    %2048 = vmatpush.msra.mxu0 %v1806
    %2049 = vmatpush.msra.mxu0 %v1803
    %2050 = vmatpush.msra.mxu0 %v1800
    %2051 = vmatpush.msra.mxu0 %v1797
    %2052 = vmatpush.msra.mxu0 %v1794
    %2053 = vmatpush.msra.mxu0 %v1791
    %2054 = vmatpush.msra.mxu0 %v1788
    %2055 = vmatpush.msra.mxu0 %v1785
    %2056 = vmatmul.f32.gmra.mxu0 %v2024
    %v2057 = vpop.f32.mrf.mxu0
    %v2058 = vadd.f32 0.0, %v2057
    %2059 = vmatmul.f32.gmra.mxu0 %v2027
    %v2060 = vpop.f32.mrf.mxu0
    %v2061 = vadd.f32 0.0, %v2060
    %2062 = vmatmul.f32.gmra.mxu0 %v2030
    %v2063 = vpop.f32.mrf.mxu0
    %v2064 = vadd.f32 0.0, %v2063
    %2065 = vmatmul.f32.gmra.mxu0 %v2033
    %v2066 = vpop.f32.mrf.mxu0
    %v2067 = vadd.f32 0.0, %v2066
    %2068 = vdwg.mxu0
    %s2069 = scalar_lea.vmem [#allocation3], 224
    %2070 = vst [vmem:[%s2069] sm:$0xff] %v2058
    %2071 = vst [vmem:[%s2069 + $0x8] sm:$0xff] %v2061
    %2072 = vst [vmem:[%s2069 + $0x10] sm:$0xff] %v2064
    %2073 = vst [vmem:[%s2069 + $0x18] sm:$0xff] %v2067
    // Predicated region
    $region26: #{tpu_custom_call.1} parent=1 // pred_check
      _
    $region27: #{tpu_custom_call.1} parent=1 // pred_check_branch
      %2075 = sbr.rel (0) target = $region29
    $region28: #{tpu_custom_call.1} parent=1 // pred_region
      %2077 = vsyncadd [#allocation4], 0
      %s2078 = sshll.u32 [#allocation3], 4
      %s2079 = int_to_ptr.vmem [resolvable:$true] %s2078
      %s2080 = sshll.u32 %s6, 4
      %s2081 = int_to_ptr.hbm [resolvable:$true] %s2080
      %2086 = dma.vmem_to_hbm [thread:$0]  %s2079, 4096, %s2081, [#allocation4], 128, 128, 8
    $region29: #{tpu_custom_call.1} parent=1 // pred_fallthru
      _
    // Predicated region
    $region30: #{tpu_custom_call.1} parent=1 // pred_check
      _
    $region31: #{tpu_custom_call.1} parent=1 // pred_check_branch
      %2088 = sbr.rel (0) target = $region33
    $region32: #{tpu_custom_call.1} parent=1 // pred_region
      %2090 = dma.done [#allocation4], 4096
    $region33: #{tpu_custom_call.1} parent=1 // pred_fallthru
      _
    %2091 = vsyncpa [#allocation4], 1

</llo_original>
